<compile_context>
chip_gen: v7x
topology: tpu7x:2x2x1
jax: 0.10.0
libtpu: 0.0.40
codegen_flags: <defaults>
</compile_context>

<pallas_src>
import functools
import math

import jax
import jax.numpy as jnp
from jax.experimental import pallas as pl
from jax.experimental.pallas import tpu as pltpu


# ----------------------- per-generation VMEM budget & tiling helpers -----------------------

def _vmem_budget_bytes():
    """Scoped-VMEM budget from the chip: v5e/v6e (128 MiB) -> 96 MiB, v7x (64 MiB) -> 48 MiB."""
    try:
        cap = pltpu.get_tpu_info().vmem_capacity_bytes
    except Exception:                      # query unavailable -> conservative default
        cap = 64 * 1024 * 1024
    return min(96 * 1024 * 1024, (cap * 3) // 4)


_VMEM_LIMIT = _vmem_budget_bytes()


def _pick_tile(dim, candidates):
    """Largest candidate tile that divides `dim`, else the full dim (always legal)."""
    for c in candidates:
        if dim % c == 0:
            return c
    return dim


def _pad_rows(x, multiple=8):
    """Pad the token axis to a multiple of 8 so a sublane tile always divides (avoids the
    one-huge-block fallback for awkward B*S)."""
    m = x.shape[0]
    pad = (-m) % multiple
    if pad:
        x = jnp.pad(x, ((0, pad),) + ((0, 0),) * (x.ndim - 1))
    return x, m


def _dense_footprint(tm, tn, tk, in_bytes, out_bytes, extra_row_blocks=0):
    """Rough double-buffered VMEM bytes of one dense grid step (+ f32 accumulator)."""
    return (2 * (tm * tk * in_bytes + tk * tn * 2 + tm * tn * out_bytes
                 + extra_row_blocks * tm * tn * in_bytes + 4 * tn * 4)
            + tm * tn * 4)


def _mxu(v):
    """Feed the MXU bf16 operands; no-op when activations already arrive bf16."""
    return v if v.dtype == jnp.bfloat16 else v.astype(jnp.bfloat16)


def _erf(x):
    # TODO(synk): lax.erf lowering inside Mosaic is not guaranteed, so exact-erf GELU uses
    # the Abramowitz&Stegun 7.1.26 polynomial (|err| <= 1.5e-7 ~= f32 eps).
    a1, a2, a3, a4, a5 = 0.254829592, -0.284496736, 1.421413741, -1.453152027, 1.061405429
    p = 0.3275911
    ax = jnp.abs(x)
    t = 1.0 / (1.0 + p * ax)
    poly = ((((a5 * t + a4) * t + a3) * t + a2) * t + a1) * t
    y = 1.0 - poly * jnp.exp(-ax * ax)
    return jnp.where(x < 0.0, -y, y)


def _gelu_exact(x):
    return 0.5 * x * (1.0 + _erf(x * 0.7071067811865476))


# ----------------------------- tiled dense (+ optional fused GELU) -----------------------------

def _dense_kernel(x_ref, w_ref, b_ref, o_ref, acc_ref, *, activation):
    @pl.when(pl.program_id(2) == 0)
    def _():
        acc_ref[...] = jnp.zeros_like(acc_ref)

    acc_ref[...] += jnp.dot(_mxu(x_ref[...]), _mxu(w_ref[...]),
                            preferred_element_type=jnp.float32)

    @pl.when(pl.program_id(2) == pl.num_programs(2) - 1)
    def _():
        acc = acc_ref[...] + b_ref[...]          # (1, tn) bias broadcasts over rows
        if activation == "gelu":
            acc = _gelu_exact(acc)
        o_ref[...] = acc.astype(o_ref.dtype)


def dense(x, w, b, activation=None, out_dtype=jnp.bfloat16):
    """y = act(x @ w + b).  x:(M,K) bf16, w:(K,N) bf16, b:(N,) f32 -> (M,N) out_dtype."""
    _, K = x.shape
    K2, N = w.shape
    assert K == K2
    x, m_orig = _pad_rows(x)
    M = x.shape[0]
    in_b = jnp.dtype(x.dtype).itemsize
    out_b = jnp.dtype(out_dtype).itemsize

    tm = _pick_tile(M, (512, 256, 128, 64, 32, 16, 8))
    tk = _pick_tile(K, (1024, 512, 256, 128))
    # Prefer a full-width output tile: x is then streamed from HBM exactly once.
    if _dense_footprint(tm, N, tk, in_b, out_b) <= _VMEM_LIMIT // 2:
        tn = N
    else:
        tn = _pick_tile(N, (2048, 1024, 512, 256, 128))
    while _dense_footprint(tm, tn, tk, in_b, out_b) > _VMEM_LIMIT // 2:
        if tk > 128 and K % (tk // 2) == 0:
            tk //= 2
        elif tn > 128 and N % (tn // 2) == 0:
            tn //= 2
        elif tm > 8 and M % (tm // 2) == 0:
            tm //= 2
        else:
            break

    b2 = b.reshape(1, N).astype(jnp.float32)
    out = pl.pallas_call(
        functools.partial(_dense_kernel, activation=activation),
        grid=(M // tm, N // tn, K // tk),
        in_specs=[
            pl.BlockSpec((tm, tk), lambda i, j, k: (i, k)),
            pl.BlockSpec((tk, tn), lambda i, j, k: (k, j)),
            pl.BlockSpec((1, tn), lambda i, j, k: (0, j)),
        ],
        out_specs=pl.BlockSpec((tm, tn), lambda i, j, k: (i, j)),
        out_shape=jax.ShapeDtypeStruct((M, N), out_dtype),
        scratch_shapes=[pltpu.VMEM((tm, tn), jnp.float32)],
        compiler_params=pltpu.CompilerParams(
            dimension_semantics=("parallel", "parallel", "arbitrary"),
            vmem_limit_bytes=_VMEM_LIMIT),
    )(x, w, b2)
    return out[:m_orig]


# --------------------- tiled dense with fused bias + residual + LayerNorm ---------------------

def _dense_ln_kernel(x_ref, w_ref, b_ref, r_ref, g_ref, bt_ref, o_ref, acc_ref, *, eps):
    @pl.when(pl.program_id(1) == 0)
    def _():
        acc_ref[...] = jnp.zeros_like(acc_ref)

    acc_ref[...] += jnp.dot(_mxu(x_ref[...]), _mxu(w_ref[...]),
                            preferred_element_type=jnp.float32)

    @pl.when(pl.program_id(1) == pl.num_programs(1) - 1)
    def _():
        y = acc_ref[...] + b_ref[...] + r_ref[...].astype(jnp.float32)
        mean = jnp.mean(y, axis=-1, keepdims=True)
        cent = y - mean
        var = jnp.mean(cent * cent, axis=-1, keepdims=True)
        inv = jax.lax.rsqrt(var + eps)
        o_ref[...] = (cent * inv * g_ref[...] + bt_ref[...]).astype(o_ref.dtype)


def dense_residual_layernorm(x, w, b, residual, gamma, beta, eps=1e-12,
                             out_dtype=jnp.bfloat16):
    """LayerNorm(x @ w + b + residual) over last axis (BERT eps, biased variance)."""
    M_in, K = x.shape
    K2, N = w.shape
    assert K == K2 and residual.shape == (M_in, N)
    x, m_orig = _pad_rows(x)
    residual, _ = _pad_rows(residual)
    M = x.shape[0]
    in_b = jnp.dtype(x.dtype).itemsize
    out_b = jnp.dtype(out_dtype).itemsize

    tm = _pick_tile(M, (512, 256, 128, 64, 32, 16, 8))
    tk = _pick_tile(K, (1024, 512, 256, 128))
    while _dense_footprint(tm, N, tk, in_b, out_b, extra_row_blocks=1) > _VMEM_LIMIT // 2:
        if tk > 128 and K % (tk // 2) == 0:
            tk //= 2
        elif tm > 8 and M % (tm // 2) == 0:
            tm //= 2
        else:
            break

    b2 = b.reshape(1, N).astype(jnp.float32)
    g2 = gamma.reshape(1, N).astype(jnp.float32)
    bt2 = beta.reshape(1, N).astype(jnp.float32)
    out = pl.pallas_call(
        functools.partial(_dense_ln_kernel, eps=eps),
        grid=(M // tm, K // tk),
        in_specs=[
            pl.BlockSpec((tm, tk), lambda i, k: (i, k)),
            pl.BlockSpec((tk, N), lambda i, k: (k, 0)),
            pl.BlockSpec((1, N), lambda i, k: (0, 0)),
            pl.BlockSpec((tm, N), lambda i, k: (i, 0)),
            pl.BlockSpec((1, N), lambda i, k: (0, 0)),
            pl.BlockSpec((1, N), lambda i, k: (0, 0)),
        ],
        out_specs=pl.BlockSpec((tm, N), lambda i, k: (i, 0)),
        out_shape=jax.ShapeDtypeStruct((M, N), out_dtype),
        scratch_shapes=[pltpu.VMEM((tm, N), jnp.float32)],
        compiler_params=pltpu.CompilerParams(
            dimension_semantics=("parallel", "arbitrary"),
            vmem_limit_bytes=_VMEM_LIMIT),
    )(x, w, b2, residual, g2, bt2)
    return out[:m_orig]


# ------------------------------- plain LayerNorm (embeddings) -------------------------------

def _layernorm_kernel(x_ref, g_ref, b_ref, o_ref, *, eps):
    x = x_ref[...].astype(jnp.float32)
    mean = jnp.mean(x, axis=-1, keepdims=True)
    cent = x - mean
    var = jnp.mean(cent * cent, axis=-1, keepdims=True)
    inv = jax.lax.rsqrt(var + eps)
    o_ref[...] = (cent * inv * g_ref[...] + b_ref[...]).astype(o_ref.dtype)


def layernorm(x, gamma, beta, eps=1e-12, out_dtype=jnp.bfloat16):
    _, H = x.shape
    x, m_orig = _pad_rows(x)
    M = x.shape[0]
    tm = _pick_tile(M, (512, 256, 128, 64, 32, 16, 8))
    g2 = gamma.reshape(1, H).astype(jnp.float32)
    b2 = beta.reshape(1, H).astype(jnp.float32)
    out = pl.pallas_call(
        functools.partial(_layernorm_kernel, eps=eps),
        grid=(M // tm,),
        in_specs=[
            pl.BlockSpec((tm, H), lambda i: (i, 0)),
            pl.BlockSpec((1, H), lambda i: (0, 0)),
            pl.BlockSpec((1, H), lambda i: (0, 0)),
        ],
        out_specs=pl.BlockSpec((tm, H), lambda i: (i, 0)),
        out_shape=jax.ShapeDtypeStruct((M, H), out_dtype),
        compiler_params=pltpu.CompilerParams(
            dimension_semantics=("parallel",),
            vmem_limit_bytes=_VMEM_LIMIT),
    )(x, g2, b2)
    return out[:m_orig]


# ------------------------------------ multi-head attention -----------------------------------

def _softmax_context(q, k, v, mask):
    # q already carries the 1/sqrt(head_dim) scale (folded into the QKV weights at init).
    s = jax.lax.dot_general(q, k, (((1,), (1,)), ((), ())),
                            preferred_element_type=jnp.float32)
    s = s + mask                                                 # (1,S) additive mask
    p = jnp.exp(s - jnp.max(s, axis=-1, keepdims=True))
    p = p * pl.reciprocal(jnp.sum(p, axis=-1, keepdims=True), approx=True)  # EUP recip
    return jnp.dot(p.astype(jnp.bfloat16), v, preferred_element_type=jnp.float32)


def _attention_group_kernel(q_ref, k_ref, v_ref, m_ref, o_ref, *,
                            heads_per_group, head_dim):
    mask = m_ref[0]                                              # (1, S) f32
    qg, kg, vg = q_ref[0], k_ref[0], v_ref[0]                    # (S, G*Dh) bf16 each
    for h in range(heads_per_group):                             # tiny unroll (<= 128//Dh)
        lo = h * head_dim
        ctx = _softmax_context(qg[:, lo:lo + head_dim], kg[:, lo:lo + head_dim],
                               vg[:, lo:lo + head_dim], mask)
        o_ref[0, :, lo:lo + head_dim] = ctx.astype(o_ref.dtype)  # direct per-head store


def _attention_full_kernel(qkv_ref, m_ref, o_ref, *, num_heads, head_dim, hidden):
    mask = m_ref[0]                                              # (1, S) f32
    qkv = qkv_ref[0]                                             # (S, 3H) bf16
    for h in range(num_heads):
        lo = h * head_dim
        ctx = _softmax_context(qkv[:, lo:lo + head_dim],
                               qkv[:, hidden + lo:hidden + lo + head_dim],
                               qkv[:, 2 * hidden + lo:2 * hidden + lo + head_dim],
                               mask)
        o_ref[0, :, lo:lo + head_dim] = ctx.astype(o_ref.dtype)


def attention(qkv, mask, num_heads):
    """qkv:(B,S,3H) bf16 fused projection (scale folded into Q); mask:(B,1,S) additive f32.
    Returns (B,S,H) bf16."""
    B, S, H3 = qkv.shape
    H = H3 // 3
    Dh = H // num_heads

    # Heads per group chosen so the group's lane width (G*Dh) is 128-aligned (head pairing
    # at Dh=64) -- grid over (batch, head_group) with direct per-group output blocks.
    heads_per_group = 0
    if Dh % 128 == 0:
        heads_per_group = 1
    elif 128 % Dh == 0 and num_heads % (128 // Dh) == 0:
        heads_per_group = 128 // Dh

    if heads_per_group:
        ng = num_heads // heads_per_group
        gd = heads_per_group * Dh
        return pl.pallas_call(
            functools.partial(_attention_group_kernel,
                              heads_per_group=heads_per_group, head_dim=Dh),
            grid=(B, ng),
            in_specs=[   # three 128-lane-aligned views of the same fused QKV tensor
                pl.BlockSpec((1, S, gd), lambda b, g: (b, 0, g)),
                pl.BlockSpec((1, S, gd), lambda b, g: (b, 0, ng + g)),
                pl.BlockSpec((1, S, gd), lambda b, g: (b, 0, 2 * ng + g)),
                pl.BlockSpec((1, 1, S), lambda b, g: (b, 0, 0)),
            ],
            out_specs=pl.BlockSpec((1, S, gd), lambda b, g: (b, 0, g)),
            out_shape=jax.ShapeDtypeStruct((B, S, H), qkv.dtype),
            compiler_params=pltpu.CompilerParams(
                dimension_semantics=("parallel", "parallel"),
                vmem_limit_bytes=_VMEM_LIMIT),
        )(qkv, qkv, qkv, mask)

    # Fallback: whole (S,3H) block per batch when head slices cannot be 128-lane aligned
    # (e.g. tiny hidden sizes / odd head counts); still writes each head directly.
    return pl.pallas_call(
        functools.partial(_attention_full_kernel, num_heads=num_heads,
                          head_dim=Dh, hidden=H),
        grid=(B,),
        in_specs=[
            pl.BlockSpec((1, S, H3), lambda b: (b, 0, 0)),
            pl.BlockSpec((1, 1, S), lambda b: (b, 0, 0)),
        ],
        out_specs=pl.BlockSpec((1, S, H), lambda b: (b, 0, 0)),
        out_shape=jax.ShapeDtypeStruct((B, S, H), qkv.dtype),
        compiler_params=pltpu.CompilerParams(
            dimension_semantics=("parallel",),
            vmem_limit_bytes=_VMEM_LIMIT),
    )(qkv, mask)
    # TODO(synk): for very long sequences (S x S scores exceeding VMEM) this should become a
    # flash-style KV-tiled kernel; at BERT lengths the (S,S) scores fit comfortably.


# ----------------------------------- parameters (synthetic) ----------------------------------

def init_params(key, vocab_size, hidden, num_layers, max_pos, intermediate,
                num_heads, out_size=2):
    keys = iter(jax.random.split(key, 8 + 4 * num_layers))
    std = 0.02
    inv_sqrt_dh = 1.0 / math.sqrt(hidden // num_heads)

    def randn(shape):
        return jax.random.normal(next(keys), shape, jnp.float32) * std

    params = {
        "word_emb": randn((vocab_size, hidden)),
        "pos_emb": randn((max_pos, hidden)),
        "type_emb": randn((2, hidden)),
        "emb_ln_g": jnp.ones((hidden,), jnp.float32),
        "emb_ln_b": jnp.zeros((hidden,), jnp.float32),
        "layers": [],
        "last_w": randn((hidden, hidden)),
        "last_b": jnp.zeros((hidden,), jnp.float32),
        "out_w": randn((hidden, out_size)),
        "out_b": jnp.zeros((out_size,), jnp.float32),
    }
    for _ in range(num_layers):
        # Fused QKV projection: qkv_w == concat([Wq, Wk, Wv], axis=1) with heads head-major
        # inside each block.  The 1/sqrt(head_dim) attention scale is folded into the Q
        # columns (and Q bias), so the attention kernel never scales the (S,S) scores.
        qkv_w = randn((hidden, 3 * hidden))
        qkv_w = qkv_w.at[:, :hidden].multiply(inv_sqrt_dh)
        qkv_b = jnp.zeros((3 * hidden,), jnp.float32)
        qkv_b = qkv_b.at[:hidden].multiply(inv_sqrt_dh)
        params["layers"].append({
            "qkv_w": qkv_w.astype(jnp.bfloat16), "qkv_b": qkv_b,
            "ao_w": randn((hidden, hidden)).astype(jnp.bfloat16),
            "ao_b": jnp.zeros((hidden,), jnp.float32),
            "attn_ln_g": jnp.ones((hidden,), jnp.float32),
            "attn_ln_b": jnp.zeros((hidden,), jnp.float32),
            "i_w": randn((hidden, intermediate)).astype(jnp.bfloat16),
            "i_b": jnp.zeros((intermediate,), jnp.float32),
            "o_w": randn((intermediate, hidden)).astype(jnp.bfloat16),
            "o_b": jnp.zeros((hidden,), jnp.float32),
            "out_ln_g": jnp.ones((hidden,), jnp.float32),
            "out_ln_b": jnp.zeros((hidden,), jnp.float32),
        })
    return params


# --------------------------------------- forward pass ----------------------------------------

def bert_inter_forward(params, input_ids, attention_mask, token_type_ids, num_heads):
    B, S = input_ids.shape
    H = params["word_emb"].shape[1]

    # --- embeddings (gathers stay in XLA) ---
    pos_ids = jnp.arange(S)
    emb = (params["word_emb"][input_ids]
           + params["pos_emb"][pos_ids][None, :, :]
           + params["type_emb"][token_type_ids])                 # (B, S, H) f32
    x = layernorm(emb.reshape(B * S, H), params["emb_ln_g"], params["emb_ln_b"])  # bf16
    # TODO(synk): dropout layers are identity (inference / eval semantics).

    # HF-style extended additive attention mask, kept f32 (dtype-min overflows bf16)
    ext_mask = ((1.0 - attention_mask.astype(jnp.float32))
                * jnp.finfo(jnp.float32).min)[:, None, :]        # (B, 1, S)

    for lp in params["layers"]:
        # --- self attention (fused QKV stays bf16 end-to-end between kernels) ---
        qkv = dense(x, lp["qkv_w"], lp["qkv_b"])                 # (B*S, 3H) bf16
        ctx = attention(qkv.reshape(B, S, 3 * H), ext_mask, num_heads)   # (B, S, H) bf16
        x = dense_residual_layernorm(ctx.reshape(B * S, H), lp["ao_w"], lp["ao_b"],
                                     x, lp["attn_ln_g"], lp["attn_ln_b"])
        # --- feed forward (GELU fused into the intermediate dense, bf16 intermediate) ---
        inter = dense(x, lp["i_w"], lp["i_b"], activation="gelu")
        x = dense_residual_layernorm(inter, lp["o_w"], lp["o_b"],
                                     x, lp["out_ln_g"], lp["out_ln_b"])

    # --- heads on CLS token: tiny (<8 sublanes, 2-lane output) -> plain XLA ---
    x = x.reshape(B, S, H)
    cls = x[:, 0].astype(jnp.float32)                            # (B, H)
    out = jnp.tanh(jnp.dot(cls, params["last_w"]) + params["last_b"])
    out = jnp.dot(out, params["out_w"]) + params["out_b"]        # (B, 2) f32
    return out


# -------------------------------------------- main --------------------------------------------

if __name__ == "__main__":
    B, S = 2, 8
    hidden = 32
    num_layers = 2
    num_heads = 4
    vocab = 100
    max_pos = 64
    intermediate = hidden * 4

    key = jax.random.PRNGKey(0)
    pkey, ikey = jax.random.split(key)
    params = init_params(pkey, vocab, hidden, num_layers, max_pos, intermediate, num_heads)

    input_ids = jax.random.randint(ikey, (B, S), 0, vocab, dtype=jnp.int32)
    attention_masks = jnp.ones((B, S), dtype=jnp.int32)
    token_type_ids = jnp.zeros((B, S), dtype=jnp.int32)

    fwd = jax.jit(functools.partial(bert_inter_forward, num_heads=num_heads))
    out = fwd(params, input_ids, attention_masks, token_type_ids)
    out = jax.block_until_ready(out)
    assert out.shape == (B, 2) and out.dtype == jnp.float32
    print("KERNEL_OK")
</pallas_src>

<mosaic_0001>
module attributes {stable_mosaic.version = 11 : i64} {
  func.func @_layernorm_kernel(%arg0: i32, %arg1: memref<16x32xf32, #tpu.memory_space<vmem>>, %arg2: memref<1x32xf32, #tpu.memory_space<vmem>>, %arg3: memref<1x32xf32, #tpu.memory_space<vmem>>, %arg4: memref<16x32xbf16, #tpu.memory_space<vmem>>) attributes {dimension_semantics = [#tpu.dimension_semantics<parallel>], iteration_bounds = array<i64: 1>, scalar_prefetch = 0 : i64, scratch_operands = 0 : i64, tpu.core_type = #tpu.core_type<tc>, window_params = [{transform_indices = @transform_0, window_bounds = array<i64: 16, 32>}, {pipeline_mode = #tpu.pipeline_mode<synchronous>, transform_indices = @transform_1, window_bounds = array<i64: 1, 32>}, {pipeline_mode = #tpu.pipeline_mode<synchronous>, transform_indices = @transform_2, window_bounds = array<i64: 1, 32>}, {transform_indices = @transform_3, window_bounds = array<i64: 16, 32>}]} {
    %c0 = arith.constant 0 : index
    %c0_0 = arith.constant 0 : index
    %0 = vector.load %arg1[%c0, %c0_0] : memref<16x32xf32, #tpu.memory_space<vmem>>, vector<16x32xf32>
    %cst = arith.constant dense<0.000000e+00> : vector<16xf32>
    %1 = vector.multi_reduction <add>, %0, %cst [1] : vector<16x32xf32> to vector<16xf32>
    %2 = vector.shape_cast %1 : vector<16xf32> to vector<16x1xf32>
    %cst_1 = arith.constant 3.200000e+01 : f32
    %3 = vector.broadcast %cst_1 : f32 to vector<16x1xf32>
    %4 = arith.divf %2, %3 : vector<16x1xf32>
    %5 = vector.broadcast %4 : vector<16x1xf32> to vector<16x32xf32>
    %6 = arith.subf %0, %5 : vector<16x32xf32>
    %7 = arith.mulf %6, %6 : vector<16x32xf32>
    %cst_2 = arith.constant dense<0.000000e+00> : vector<16xf32>
    %8 = vector.multi_reduction <add>, %7, %cst_2 [1] : vector<16x32xf32> to vector<16xf32>
    %9 = vector.shape_cast %8 : vector<16xf32> to vector<16x1xf32>
    %cst_3 = arith.constant 3.200000e+01 : f32
    %10 = vector.broadcast %cst_3 : f32 to vector<16x1xf32>
    %11 = arith.divf %9, %10 : vector<16x1xf32>
    %cst_4 = arith.constant 9.99999996E-13 : f32
    %12 = vector.broadcast %cst_4 : f32 to vector<16x1xf32>
    %13 = arith.addf %11, %12 : vector<16x1xf32>
    %14 = math.rsqrt %13 : vector<16x1xf32>
    %15 = vector.broadcast %14 : vector<16x1xf32> to vector<16x32xf32>
    %16 = arith.mulf %6, %15 : vector<16x32xf32>
    %c0_5 = arith.constant 0 : index
    %c0_6 = arith.constant 0 : index
    %17 = vector.load %arg2[%c0_5, %c0_6] : memref<1x32xf32, #tpu.memory_space<vmem>>, vector<1x32xf32>
    %18 = vector.broadcast %17 : vector<1x32xf32> to vector<16x32xf32>
    %19 = arith.mulf %16, %18 : vector<16x32xf32>
    %c0_7 = arith.constant 0 : index
    %c0_8 = arith.constant 0 : index
    %20 = vector.load %arg3[%c0_7, %c0_8] : memref<1x32xf32, #tpu.memory_space<vmem>>, vector<1x32xf32>
    %21 = vector.broadcast %20 : vector<1x32xf32> to vector<16x32xf32>
    %22 = arith.addf %19, %21 : vector<16x32xf32>
    %23 = arith.truncf %22 : vector<16x32xf32> to vector<16x32xbf16>
    %c0_9 = arith.constant 0 : index
    %c0_10 = arith.constant 0 : index
    %24 = vector.load %arg4[%c0_9, %c0_10] : memref<16x32xbf16, #tpu.memory_space<vmem>>, vector<16x32xbf16>
    tpu.vector_store %arg4[%c0_9, %c0_10], %23 {strides = array<i32>} : memref<16x32xbf16, #tpu.memory_space<vmem>>, vector<16x32xbf16>,
    return
  }
  func.func @transform_0(%arg0: i32) -> (i32, i32) {
    %c0_i32 = arith.constant 0 : i32
    %c0_i32_0 = arith.constant 0 : i32
    return %arg0, %c0_i32 : i32, i32
  }
  func.func @transform_1(%arg0: i32) -> (i32, i32) {
    %c0_i32 = arith.constant 0 : i32
    %c0_i32_0 = arith.constant 0 : i32
    %c0_i32_1 = arith.constant 0 : i32
    return %c0_i32, %c0_i32_0 : i32, i32
  }
  func.func @transform_2(%arg0: i32) -> (i32, i32) {
    %c0_i32 = arith.constant 0 : i32
    %c0_i32_0 = arith.constant 0 : i32
    %c0_i32_1 = arith.constant 0 : i32
    return %c0_i32, %c0_i32_0 : i32, i32
  }
  func.func @transform_3(%arg0: i32) -> (i32, i32) {
    %c0_i32 = arith.constant 0 : i32
    %c0_i32_0 = arith.constant 0 : i32
    return %arg0, %c0_i32 : i32, i32
  }
}

module attributes {stable_mosaic.version = 11 : i64} {
  func.func @_attention_full_kernel(%arg0: i32, %arg1: memref<1x8x96xbf16, #tpu.memory_space<vmem>>, %arg2: memref<1x1x8xf32, #tpu.memory_space<vmem>>, %arg3: memref<1x8x32xbf16, #tpu.memory_space<vmem>>) attributes {dimension_semantics = [#tpu.dimension_semantics<parallel>], iteration_bounds = array<i64: 2>, scalar_prefetch = 0 : i64, scratch_operands = 0 : i64, tpu.core_type = #tpu.core_type<tc>, window_params = [{transform_indices = @transform_0, window_bounds = array<i64: 1, 8, 96>}, {transform_indices = @transform_1, window_bounds = array<i64: 1, 1, 8>}, {transform_indices = @transform_2, window_bounds = array<i64: 1, 8, 32>}]} {
    %c0 = arith.constant 0 : index
    %c0_0 = arith.constant 0 : index
    %c0_1 = arith.constant 0 : index
    %0 = vector.load %arg2[%c0, %c0_0, %c0_1] : memref<1x1x8xf32, #tpu.memory_space<vmem>>, vector<1x1x8xf32>
    %1 = vector.shape_cast %0 : vector<1x1x8xf32> to vector<1x8xf32>
    %c0_2 = arith.constant 0 : index
    %c0_3 = arith.constant 0 : index
    %c0_4 = arith.constant 0 : index
    %2 = vector.load %arg1[%c0_2, %c0_3, %c0_4] : memref<1x8x96xbf16, #tpu.memory_space<vmem>>, vector<1x8x96xbf16>
    %3 = vector.shape_cast %2 : vector<1x8x96xbf16> to vector<8x96xbf16>
    %4 = vector.extract_strided_slice %3 {offsets = [0, 0], sizes = [8, 8], strides = [1, 1]} : vector<8x96xbf16> to vector<8x8xbf16>
    %5 = vector.extract_strided_slice %3 {offsets = [0, 32], sizes = [8, 8], strides = [1, 1]} : vector<8x96xbf16> to vector<8x8xbf16>
    %6 = vector.extract_strided_slice %3 {offsets = [0, 64], sizes = [8, 8], strides = [1, 1]} : vector<8x96xbf16> to vector<8x8xbf16>
    %cst = arith.constant dense<0.000000e+00> : vector<8x8xf32>
    %7 = tpu.matmul %4, %5, %cst {dimension_numbers = #tpu.dot_dimension_numbers<[1], [1], [0], [0], [0, 0, 1, 0], [], []>} : vector<8x8xbf16>, vector<8x8xbf16>, vector<8x8xf32> -> vector<8x8xf32>
    %8 = vector.broadcast %1 : vector<1x8xf32> to vector<8x8xf32>
    %9 = arith.addf %7, %8 : vector<8x8xf32>
    %cst_5 = arith.constant dense<0xFF800000> : vector<8xf32>
    %10 = vector.multi_reduction <maximumf>, %9, %cst_5 [1] : vector<8x8xf32> to vector<8xf32>
    %11 = vector.shape_cast %10 : vector<8xf32> to vector<8x1xf32>
    %12 = vector.broadcast %11 : vector<8x1xf32> to vector<8x8xf32>
    %13 = arith.subf %9, %12 : vector<8x8xf32>
    %14 = math.exp %13 : vector<8x8xf32>
    %cst_6 = arith.constant dense<0.000000e+00> : vector<8xf32>
    %15 = vector.multi_reduction <add>, %14, %cst_6 [1] : vector<8x8xf32> to vector<8xf32>
    %16 = vector.shape_cast %15 : vector<8xf32> to vector<8x1xf32>
    %17 = tpu.reciprocal %16 {approx = true} : vector<8x1xf32> -> vector<8x1xf32>
    %18 = vector.broadcast %17 : vector<8x1xf32> to vector<8x8xf32>
    %19 = arith.mulf %14, %18 : vector<8x8xf32>
    %20 = arith.truncf %19 : vector<8x8xf32> to vector<8x8xbf16>
    %cst_7 = arith.constant dense<0.000000e+00> : vector<8x8xf32>
    %21 = tpu.matmul %20, %6, %cst_7 {dimension_numbers = #tpu.dot_dimension_numbers<[1], [0], [0], [1], [0, 0, 1, 1], [], []>} : vector<8x8xbf16>, vector<8x8xbf16>, vector<8x8xf32> -> vector<8x8xf32>
    %22 = arith.truncf %21 : vector<8x8xf32> to vector<8x8xbf16>
    %c0_8 = arith.constant 0 : index
    %c0_9 = arith.constant 0 : index
    %c0_10 = arith.constant 0 : index
    %23 = vector.load %arg3[%c0_8, %c0_9, %c0_10] : memref<1x8x32xbf16, #tpu.memory_space<vmem>>, vector<1x8x8xbf16>
    %24 = vector.shape_cast %23 : vector<1x8x8xbf16> to vector<8x8xbf16>
    %25 = vector.shape_cast %22 : vector<8x8xbf16> to vector<1x8x8xbf16>
    tpu.vector_store %arg3[%c0_8, %c0_9, %c0_10], %25 {strides = array<i32>} : memref<1x8x32xbf16, #tpu.memory_space<vmem>>, vector<1x8x8xbf16>,
    %26 = vector.extract_strided_slice %3 {offsets = [0, 8], sizes = [8, 8], strides = [1, 1]} : vector<8x96xbf16> to vector<8x8xbf16>
    %27 = vector.extract_strided_slice %3 {offsets = [0, 40], sizes = [8, 8], strides = [1, 1]} : vector<8x96xbf16> to vector<8x8xbf16>
    %28 = vector.extract_strided_slice %3 {offsets = [0, 72], sizes = [8, 8], strides = [1, 1]} : vector<8x96xbf16> to vector<8x8xbf16>
    %cst_11 = arith.constant dense<0.000000e+00> : vector<8x8xf32>
    %29 = tpu.matmul %26, %27, %cst_11 {dimension_numbers = #tpu.dot_dimension_numbers<[1], [1], [0], [0], [0, 0, 1, 0], [], []>} : vector<8x8xbf16>, vector<8x8xbf16>, vector<8x8xf32> -> vector<8x8xf32>
    %30 = vector.broadcast %1 : vector<1x8xf32> to vector<8x8xf32>
    %31 = arith.addf %29, %30 : vector<8x8xf32>
    %cst_12 = arith.constant dense<0xFF800000> : vector<8xf32>
    %32 = vector.multi_reduction <maximumf>, %31, %cst_12 [1] : vector<8x8xf32> to vector<8xf32>
    %33 = vector.shape_cast %32 : vector<8xf32> to vector<8x1xf32>
    %34 = vector.broadcast %33 : vector<8x1xf32> to vector<8x8xf32>
    %35 = arith.subf %31, %34 : vector<8x8xf32>
    %36 = math.exp %35 : vector<8x8xf32>
    %cst_13 = arith.constant dense<0.000000e+00> : vector<8xf32>
    %37 = vector.multi_reduction <add>, %36, %cst_13 [1] : vector<8x8xf32> to vector<8xf32>
    %38 = vector.shape_cast %37 : vector<8xf32> to vector<8x1xf32>
    %39 = tpu.reciprocal %38 {approx = true} : vector<8x1xf32> -> vector<8x1xf32>
    %40 = vector.broadcast %39 : vector<8x1xf32> to vector<8x8xf32>
    %41 = arith.mulf %36, %40 : vector<8x8xf32>
    %42 = arith.truncf %41 : vector<8x8xf32> to vector<8x8xbf16>
    %cst_14 = arith.constant dense<0.000000e+00> : vector<8x8xf32>
    %43 = tpu.matmul %42, %28, %cst_14 {dimension_numbers = #tpu.dot_dimension_numbers<[1], [0], [0], [1], [0, 0, 1, 1], [], []>} : vector<8x8xbf16>, vector<8x8xbf16>, vector<8x8xf32> -> vector<8x8xf32>
    %44 = arith.truncf %43 : vector<8x8xf32> to vector<8x8xbf16>
    %c0_15 = arith.constant 0 : index
    %c0_16 = arith.constant 0 : index
    %c8 = arith.constant 8 : index
    %45 = vector.load %arg3[%c0_15, %c0_16, %c8] : memref<1x8x32xbf16, #tpu.memory_space<vmem>>, vector<1x8x8xbf16>
    %46 = vector.shape_cast %45 : vector<1x8x8xbf16> to vector<8x8xbf16>
    %47 = vector.shape_cast %44 : vector<8x8xbf16> to vector<1x8x8xbf16>
    tpu.vector_store %arg3[%c0_15, %c0_16, %c8], %47 {strides = array<i32>} : memref<1x8x32xbf16, #tpu.memory_space<vmem>>, vector<1x8x8xbf16>,
    %48 = vector.extract_strided_slice %3 {offsets = [0, 16], sizes = [8, 8], strides = [1, 1]} : vector<8x96xbf16> to vector<8x8xbf16>
    %49 = vector.extract_strided_slice %3 {offsets = [0, 48], sizes = [8, 8], strides = [1, 1]} : vector<8x96xbf16> to vector<8x8xbf16>
    %50 = vector.extract_strided_slice %3 {offsets = [0, 80], sizes = [8, 8], strides = [1, 1]} : vector<8x96xbf16> to vector<8x8xbf16>
    %cst_17 = arith.constant dense<0.000000e+00> : vector<8x8xf32>
    %51 = tpu.matmul %48, %49, %cst_17 {dimension_numbers = #tpu.dot_dimension_numbers<[1], [1], [0], [0], [0, 0, 1, 0], [], []>} : vector<8x8xbf16>, vector<8x8xbf16>, vector<8x8xf32> -> vector<8x8xf32>
    %52 = vector.broadcast %1 : vector<1x8xf32> to vector<8x8xf32>
    %53 = arith.addf %51, %52 : vector<8x8xf32>
    %cst_18 = arith.constant dense<0xFF800000> : vector<8xf32>
    %54 = vector.multi_reduction <maximumf>, %53, %cst_18 [1] : vector<8x8xf32> to vector<8xf32>
    %55 = vector.shape_cast %54 : vector<8xf32> to vector<8x1xf32>
    %56 = vector.broadcast %55 : vector<8x1xf32> to vector<8x8xf32>
    %57 = arith.subf %53, %56 : vector<8x8xf32>
    %58 = math.exp %57 : vector<8x8xf32>
    %cst_19 = arith.constant dense<0.000000e+00> : vector<8xf32>
    %59 = vector.multi_reduction <add>, %58, %cst_19 [1] : vector<8x8xf32> to vector<8xf32>
    %60 = vector.shape_cast %59 : vector<8xf32> to vector<8x1xf32>
    %61 = tpu.reciprocal %60 {approx = true} : vector<8x1xf32> -> vector<8x1xf32>
    %62 = vector.broadcast %61 : vector<8x1xf32> to vector<8x8xf32>
    %63 = arith.mulf %58, %62 : vector<8x8xf32>
    %64 = arith.truncf %63 : vector<8x8xf32> to vector<8x8xbf16>
    %cst_20 = arith.constant dense<0.000000e+00> : vector<8x8xf32>
    %65 = tpu.matmul %64, %50, %cst_20 {dimension_numbers = #tpu.dot_dimension_numbers<[1], [0], [0], [1], [0, 0, 1, 1], [], []>} : vector<8x8xbf16>, vector<8x8xbf16>, vector<8x8xf32> -> vector<8x8xf32>
    %66 = arith.truncf %65 : vector<8x8xf32> to vector<8x8xbf16>
    %c0_21 = arith.constant 0 : index
    %c0_22 = arith.constant 0 : index
    %c16 = arith.constant 16 : index
    %67 = vector.load %arg3[%c0_21, %c0_22, %c16] : memref<1x8x32xbf16, #tpu.memory_space<vmem>>, vector<1x8x8xbf16>
    %68 = vector.shape_cast %67 : vector<1x8x8xbf16> to vector<8x8xbf16>
    %69 = vector.shape_cast %66 : vector<8x8xbf16> to vector<1x8x8xbf16>
    tpu.vector_store %arg3[%c0_21, %c0_22, %c16], %69 {strides = array<i32>} : memref<1x8x32xbf16, #tpu.memory_space<vmem>>, vector<1x8x8xbf16>,
    %70 = vector.extract_strided_slice %3 {offsets = [0, 24], sizes = [8, 8], strides = [1, 1]} : vector<8x96xbf16> to vector<8x8xbf16>
    %71 = vector.extract_strided_slice %3 {offsets = [0, 56], sizes = [8, 8], strides = [1, 1]} : vector<8x96xbf16> to vector<8x8xbf16>
    %72 = vector.extract_strided_slice %3 {offsets = [0, 88], sizes = [8, 8], strides = [1, 1]} : vector<8x96xbf16> to vector<8x8xbf16>
    %cst_23 = arith.constant dense<0.000000e+00> : vector<8x8xf32>
    %73 = tpu.matmul %70, %71, %cst_23 {dimension_numbers = #tpu.dot_dimension_numbers<[1], [1], [0], [0], [0, 0, 1, 0], [], []>} : vector<8x8xbf16>, vector<8x8xbf16>, vector<8x8xf32> -> vector<8x8xf32>
    %74 = vector.broadcast %1 : vector<1x8xf32> to vector<8x8xf32>
    %75 = arith.addf %73, %74 : vector<8x8xf32>
    %cst_24 = arith.constant dense<0xFF800000> : vector<8xf32>
    %76 = vector.multi_reduction <maximumf>, %75, %cst_24 [1] : vector<8x8xf32> to vector<8xf32>
    %77 = vector.shape_cast %76 : vector<8xf32> to vector<8x1xf32>
    %78 = vector.broadcast %77 : vector<8x1xf32> to vector<8x8xf32>
    %79 = arith.subf %75, %78 : vector<8x8xf32>
    %80 = math.exp %79 : vector<8x8xf32>
    %cst_25 = arith.constant dense<0.000000e+00> : vector<8xf32>
    %81 = vector.multi_reduction <add>, %80, %cst_25 [1] : vector<8x8xf32> to vector<8xf32>
    %82 = vector.shape_cast %81 : vector<8xf32> to vector<8x1xf32>
    %83 = tpu.reciprocal %82 {approx = true} : vector<8x1xf32> -> vector<8x1xf32>
    %84 = vector.broadcast %83 : vector<8x1xf32> to vector<8x8xf32>
    %85 = arith.mulf %80, %84 : vector<8x8xf32>
    %86 = arith.truncf %85 : vector<8x8xf32> to vector<8x8xbf16>
    %cst_26 = arith.constant dense<0.000000e+00> : vector<8x8xf32>
    %87 = tpu.matmul %86, %72, %cst_26 {dimension_numbers = #tpu.dot_dimension_numbers<[1], [0], [0], [1], [0, 0, 1, 1], [], []>} : vector<8x8xbf16>, vector<8x8xbf16>, vector<8x8xf32> -> vector<8x8xf32>
    %88 = arith.truncf %87 : vector<8x8xf32> to vector<8x8xbf16>
    %c0_27 = arith.constant 0 : index
    %c0_28 = arith.constant 0 : index
    %c24 = arith.constant 24 : index
    %89 = vector.load %arg3[%c0_27, %c0_28, %c24] : memref<1x8x32xbf16, #tpu.memory_space<vmem>>, vector<1x8x8xbf16>
    %90 = vector.shape_cast %89 : vector<1x8x8xbf16> to vector<8x8xbf16>
    %91 = vector.shape_cast %88 : vector<8x8xbf16> to vector<1x8x8xbf16>
    tpu.vector_store %arg3[%c0_27, %c0_28, %c24], %91 {strides = array<i32>} : memref<1x8x32xbf16, #tpu.memory_space<vmem>>, vector<1x8x8xbf16>,
    return
  }
  func.func @transform_0(%arg0: i32) -> (i32, i32, i32) {
    %c0_i32 = arith.constant 0 : i32
    %c0_i32_0 = arith.constant 0 : i32
    %c0_i32_1 = arith.constant 0 : i32
    return %arg0, %c0_i32, %c0_i32_0 : i32, i32, i32
  }
  func.func @transform_1(%arg0: i32) -> (i32, i32, i32) {
    %c0_i32 = arith.constant 0 : i32
    %c0_i32_0 = arith.constant 0 : i32
    %c0_i32_1 = arith.constant 0 : i32
    return %arg0, %c0_i32, %c0_i32_0 : i32, i32, i32
  }
  func.func @transform_2(%arg0: i32) -> (i32, i32, i32) {
    %c0_i32 = arith.constant 0 : i32
    %c0_i32_0 = arith.constant 0 : i32
    %c0_i32_1 = arith.constant 0 : i32
    return %arg0, %c0_i32, %c0_i32_0 : i32, i32, i32
  }
}

module attributes {stable_mosaic.version = 11 : i64} {
  func.func @_dense_ln_kernel(%arg0: i32, %arg1: i32, %arg2: memref<16x32xbf16, #tpu.memory_space<vmem>>, %arg3: memref<32x32xbf16, #tpu.memory_space<vmem>>, %arg4: memref<1x32xf32, #tpu.memory_space<vmem>>, %arg5: memref<16x32xbf16, #tpu.memory_space<vmem>>, %arg6: memref<1x32xf32, #tpu.memory_space<vmem>>, %arg7: memref<1x32xf32, #tpu.memory_space<vmem>>, %arg8: memref<16x32xbf16, #tpu.memory_space<vmem>>, %arg9: memref<16x32xf32, #tpu.memory_space<vmem>>) attributes {dimension_semantics = [#tpu.dimension_semantics<parallel>, #tpu.dimension_semantics<arbitrary>], iteration_bounds = array<i64: 1, 1>, scalar_prefetch = 0 : i64, scratch_operands = 1 : i64, tpu.core_type = #tpu.core_type<tc>, window_params = [{transform_indices = @transform_0, window_bounds = array<i64: 16, 32>}, {transform_indices = @transform_1, window_bounds = array<i64: 32, 32>}, {pipeline_mode = #tpu.pipeline_mode<synchronous>, transform_indices = @transform_2, window_bounds = array<i64: 1, 32>}, {transform_indices = @transform_3, window_bounds = array<i64: 16, 32>}, {pipeline_mode = #tpu.pipeline_mode<synchronous>, transform_indices = @transform_4, window_bounds = array<i64: 1, 32>}, {pipeline_mode = #tpu.pipeline_mode<synchronous>, transform_indices = @transform_5, window_bounds = array<i64: 1, 32>}, {transform_indices = @transform_6, window_bounds = array<i64: 16, 32>}]} {
    %c0_i32 = arith.constant 0 : i32
    %0 = arith.cmpi eq, %arg1, %c0_i32 : i32
    %1 = arith.extui %0 : i1 to i32
    %c0_i32_0 = arith.constant 0 : i32
    %2 = arith.cmpi ne, %1, %c0_i32_0 : i32
    scf.if %2 {
      %cst_10 = arith.constant 0.000000e+00 : f32
      %12 = vector.broadcast %cst_10 : f32 to vector<16x32xf32>
      %c0_11 = arith.constant 0 : index
      %c0_12 = arith.constant 0 : index
      %13 = vector.load %arg9[%c0_11, %c0_12] : memref<16x32xf32, #tpu.memory_space<vmem>>, vector<16x32xf32>
      tpu.vector_store %arg9[%c0_11, %c0_12], %12 {strides = array<i32>} : memref<16x32xf32, #tpu.memory_space<vmem>>, vector<16x32xf32>,
    } else {
    }
    %c0 = arith.constant 0 : index
    %c0_1 = arith.constant 0 : index
    %3 = vector.load %arg9[%c0, %c0_1] : memref<16x32xf32, #tpu.memory_space<vmem>>, vector<16x32xf32>
    %c0_2 = arith.constant 0 : index
    %c0_3 = arith.constant 0 : index
    %4 = vector.load %arg2[%c0_2, %c0_3] : memref<16x32xbf16, #tpu.memory_space<vmem>>, vector<16x32xbf16>
    %c0_4 = arith.constant 0 : index
    %c0_5 = arith.constant 0 : index
    %5 = vector.load %arg3[%c0_4, %c0_5] : memref<32x32xbf16, #tpu.memory_space<vmem>>, vector<32x32xbf16>
    %cst = arith.constant dense<0.000000e+00> : vector<16x32xf32>
    %6 = tpu.matmul %4, %5, %cst {dimension_numbers = #tpu.dot_dimension_numbers<[1], [0], [0], [1], [0, 0, 1, 1], [], []>} : vector<16x32xbf16>, vector<32x32xbf16>, vector<16x32xf32> -> vector<16x32xf32>
    %7 = arith.addf %3, %6 : vector<16x32xf32>
    %c0_6 = arith.constant 0 : index
    %c0_7 = arith.constant 0 : index
    %8 = vector.load %arg9[%c0_6, %c0_7] : memref<16x32xf32, #tpu.memory_space<vmem>>, vector<16x32xf32>
    tpu.vector_store %arg9[%c0_6, %c0_7], %7 {strides = array<i32>} : memref<16x32xf32, #tpu.memory_space<vmem>>, vector<16x32xf32>,
    %c0_i32_8 = arith.constant 0 : i32
    %9 = arith.cmpi eq, %arg1, %c0_i32_8 : i32
    %10 = arith.extui %9 : i1 to i32
    %c0_i32_9 = arith.constant 0 : i32
    %11 = arith.cmpi ne, %10, %c0_i32_9 : i32
    scf.if %11 {
      %c0_10 = arith.constant 0 : index
      %c0_11 = arith.constant 0 : index
      %12 = vector.load %arg9[%c0_10, %c0_11] : memref<16x32xf32, #tpu.memory_space<vmem>>, vector<16x32xf32>
      %c0_12 = arith.constant 0 : index
      %c0_13 = arith.constant 0 : index
      %13 = vector.load %arg4[%c0_12, %c0_13] : memref<1x32xf32, #tpu.memory_space<vmem>>, vector<1x32xf32>
      %14 = vector.broadcast %13 : vector<1x32xf32> to vector<16x32xf32>
      %15 = arith.addf %12, %14 : vector<16x32xf32>
      %c0_14 = arith.constant 0 : index
      %c0_15 = arith.constant 0 : index
      %16 = vector.load %arg5[%c0_14, %c0_15] : memref<16x32xbf16, #tpu.memory_space<vmem>>, vector<16x32xbf16>
      %17 = arith.extf %16 : vector<16x32xbf16> to vector<16x32xf32>
      %18 = arith.addf %15, %17 : vector<16x32xf32>
      %cst_16 = arith.constant dense<0.000000e+00> : vector<16xf32>
      %19 = vector.multi_reduction <add>, %18, %cst_16 [1] : vector<16x32xf32> to vector<16xf32>
      %20 = vector.shape_cast %19 : vector<16xf32> to vector<16x1xf32>
      %cst_17 = arith.constant 3.200000e+01 : f32
      %21 = vector.broadcast %cst_17 : f32 to vector<16x1xf32>
      %22 = arith.divf %20, %21 : vector<16x1xf32>
      %23 = vector.broadcast %22 : vector<16x1xf32> to vector<16x32xf32>
      %24 = arith.subf %18, %23 : vector<16x32xf32>
      %25 = arith.mulf %24, %24 : vector<16x32xf32>
      %cst_18 = arith.constant dense<0.000000e+00> : vector<16xf32>
      %26 = vector.multi_reduction <add>, %25, %cst_18 [1] : vector<16x32xf32> to vector<16xf32>
      %27 = vector.shape_cast %26 : vector<16xf32> to vector<16x1xf32>
      %cst_19 = arith.constant 3.200000e+01 : f32
      %28 = vector.broadcast %cst_19 : f32 to vector<16x1xf32>
      %29 = arith.divf %27, %28 : vector<16x1xf32>
      %cst_20 = arith.constant 9.99999996E-13 : f32
      %30 = vector.broadcast %cst_20 : f32 to vector<16x1xf32>
      %31 = arith.addf %29, %30 : vector<16x1xf32>
      %32 = math.rsqrt %31 : vector<16x1xf32>
      %33 = vector.broadcast %32 : vector<16x1xf32> to vector<16x32xf32>
      %34 = arith.mulf %24, %33 : vector<16x32xf32>
      %c0_21 = arith.constant 0 : index
      %c0_22 = arith.constant 0 : index
      %35 = vector.load %arg6[%c0_21, %c0_22] : memref<1x32xf32, #tpu.memory_space<vmem>>, vector<1x32xf32>
      %36 = vector.broadcast %35 : vector<1x32xf32> to vector<16x32xf32>
      %37 = arith.mulf %34, %36 : vector<16x32xf32>
      %c0_23 = arith.constant 0 : index
      %c0_24 = arith.constant 0 : index
      %38 = vector.load %arg7[%c0_23, %c0_24] : memref<1x32xf32, #tpu.memory_space<vmem>>, vector<1x32xf32>
      %39 = vector.broadcast %38 : vector<1x32xf32> to vector<16x32xf32>
      %40 = arith.addf %37, %39 : vector<16x32xf32>
      %41 = arith.truncf %40 : vector<16x32xf32> to vector<16x32xbf16>
      %c0_25 = arith.constant 0 : index
      %c0_26 = arith.constant 0 : index
      %42 = vector.load %arg8[%c0_25, %c0_26] : memref<16x32xbf16, #tpu.memory_space<vmem>>, vector<16x32xbf16>
      tpu.vector_store %arg8[%c0_25, %c0_26], %41 {strides = array<i32>} : memref<16x32xbf16, #tpu.memory_space<vmem>>, vector<16x32xbf16>,
    } else {
    }
    return
  }
  func.func @transform_0(%arg0: i32, %arg1: i32) -> (i32, i32) {
    %c0_i32 = arith.constant 0 : i32
    return %arg0, %arg1 : i32, i32
  }
  func.func @transform_1(%arg0: i32, %arg1: i32) -> (i32, i32) {
    %c0_i32 = arith.constant 0 : i32
    %c0_i32_0 = arith.constant 0 : i32
    return %arg1, %c0_i32 : i32, i32
  }
  func.func @transform_2(%arg0: i32, %arg1: i32) -> (i32, i32) {
    %c0_i32 = arith.constant 0 : i32
    %c0_i32_0 = arith.constant 0 : i32
    %c0_i32_1 = arith.constant 0 : i32
    return %c0_i32, %c0_i32_0 : i32, i32
  }
  func.func @transform_3(%arg0: i32, %arg1: i32) -> (i32, i32) {
    %c0_i32 = arith.constant 0 : i32
    %c0_i32_0 = arith.constant 0 : i32
    return %arg0, %c0_i32 : i32, i32
  }
  func.func @transform_4(%arg0: i32, %arg1: i32) -> (i32, i32) {
    %c0_i32 = arith.constant 0 : i32
    %c0_i32_0 = arith.constant 0 : i32
    %c0_i32_1 = arith.constant 0 : i32
    return %c0_i32, %c0_i32_0 : i32, i32
  }
  func.func @transform_5(%arg0: i32, %arg1: i32) -> (i32, i32) {
    %c0_i32 = arith.constant 0 : i32
    %c0_i32_0 = arith.constant 0 : i32
    %c0_i32_1 = arith.constant 0 : i32
    return %c0_i32, %c0_i32_0 : i32, i32
  }
  func.func @transform_6(%arg0: i32, %arg1: i32) -> (i32, i32) {
    %c0_i32 = arith.constant 0 : i32
    %c0_i32_0 = arith.constant 0 : i32
    return %arg0, %c0_i32 : i32, i32
  }
}

module attributes {stable_mosaic.version = 11 : i64} {
  func.func @_dense_kernel(%arg0: i32, %arg1: i32, %arg2: i32, %arg3: memref<16x32xbf16, #tpu.memory_space<vmem>>, %arg4: memref<32x96xbf16, #tpu.memory_space<vmem>>, %arg5: memref<1x96xf32, #tpu.memory_space<vmem>>, %arg6: memref<16x96xbf16, #tpu.memory_space<vmem>>, %arg7: memref<16x96xf32, #tpu.memory_space<vmem>>) attributes {dimension_semantics = [#tpu.dimension_semantics<parallel>, #tpu.dimension_semantics<parallel>, #tpu.dimension_semantics<arbitrary>], iteration_bounds = array<i64: 1, 1, 1>, scalar_prefetch = 0 : i64, scratch_operands = 1 : i64, tpu.core_type = #tpu.core_type<tc>, window_params = [{transform_indices = @transform_0, window_bounds = array<i64: 16, 32>}, {transform_indices = @transform_1, window_bounds = array<i64: 32, 96>}, {transform_indices = @transform_2, window_bounds = array<i64: 1, 96>}, {transform_indices = @transform_3, window_bounds = array<i64: 16, 96>}]} {
    %c0_i32 = arith.constant 0 : i32
    %0 = arith.cmpi eq, %arg2, %c0_i32 : i32
    %1 = arith.extui %0 : i1 to i32
    %c0_i32_0 = arith.constant 0 : i32
    %2 = arith.cmpi ne, %1, %c0_i32_0 : i32
    scf.if %2 {
      %cst_10 = arith.constant 0.000000e+00 : f32
      %12 = vector.broadcast %cst_10 : f32 to vector<16x96xf32>
      %c0_11 = arith.constant 0 : index
      %c0_12 = arith.constant 0 : index
      %13 = vector.load %arg7[%c0_11, %c0_12] : memref<16x96xf32, #tpu.memory_space<vmem>>, vector<16x96xf32>
      tpu.vector_store %arg7[%c0_11, %c0_12], %12 {strides = array<i32>} : memref<16x96xf32, #tpu.memory_space<vmem>>, vector<16x96xf32>,
    } else {
    }
    %c0 = arith.constant 0 : index
    %c0_1 = arith.constant 0 : index
    %3 = vector.load %arg7[%c0, %c0_1] : memref<16x96xf32, #tpu.memory_space<vmem>>, vector<16x96xf32>
    %c0_2 = arith.constant 0 : index
    %c0_3 = arith.constant 0 : index
    %4 = vector.load %arg3[%c0_2, %c0_3] : memref<16x32xbf16, #tpu.memory_space<vmem>>, vector<16x32xbf16>
    %c0_4 = arith.constant 0 : index
    %c0_5 = arith.constant 0 : index
    %5 = vector.load %arg4[%c0_4, %c0_5] : memref<32x96xbf16, #tpu.memory_space<vmem>>, vector<32x96xbf16>
    %cst = arith.constant dense<0.000000e+00> : vector<16x96xf32>
    %6 = tpu.matmul %4, %5, %cst {dimension_numbers = #tpu.dot_dimension_numbers<[1], [0], [0], [1], [0, 0, 1, 1], [], []>} : vector<16x32xbf16>, vector<32x96xbf16>, vector<16x96xf32> -> vector<16x96xf32>
    %7 = arith.addf %3, %6 : vector<16x96xf32>
    %c0_6 = arith.constant 0 : index
    %c0_7 = arith.constant 0 : index
    %8 = vector.load %arg7[%c0_6, %c0_7] : memref<16x96xf32, #tpu.memory_space<vmem>>, vector<16x96xf32>
    tpu.vector_store %arg7[%c0_6, %c0_7], %7 {strides = array<i32>} : memref<16x96xf32, #tpu.memory_space<vmem>>, vector<16x96xf32>,
    %c0_i32_8 = arith.constant 0 : i32
    %9 = arith.cmpi eq, %arg2, %c0_i32_8 : i32
    %10 = arith.extui %9 : i1 to i32
    %c0_i32_9 = arith.constant 0 : i32
    %11 = arith.cmpi ne, %10, %c0_i32_9 : i32
    scf.if %11 {
      %c0_10 = arith.constant 0 : index
      %c0_11 = arith.constant 0 : index
      %12 = vector.load %arg7[%c0_10, %c0_11] : memref<16x96xf32, #tpu.memory_space<vmem>>, vector<16x96xf32>
      %c0_12 = arith.constant 0 : index
      %c0_13 = arith.constant 0 : index
      %13 = vector.load %arg5[%c0_12, %c0_13] : memref<1x96xf32, #tpu.memory_space<vmem>>, vector<1x96xf32>
      %14 = vector.broadcast %13 : vector<1x96xf32> to vector<16x96xf32>
      %15 = arith.addf %12, %14 : vector<16x96xf32>
      %16 = arith.truncf %15 : vector<16x96xf32> to vector<16x96xbf16>
      %c0_14 = arith.constant 0 : index
      %c0_15 = arith.constant 0 : index
      %17 = vector.load %arg6[%c0_14, %c0_15] : memref<16x96xbf16, #tpu.memory_space<vmem>>, vector<16x96xbf16>
      tpu.vector_store %arg6[%c0_14, %c0_15], %16 {strides = array<i32>} : memref<16x96xbf16, #tpu.memory_space<vmem>>, vector<16x96xbf16>,
    } else {
    }
    return
  }
  func.func @transform_0(%arg0: i32, %arg1: i32, %arg2: i32) -> (i32, i32) {
    %c0_i32 = arith.constant 0 : i32
    return %arg0, %arg2 : i32, i32
  }
  func.func @transform_1(%arg0: i32, %arg1: i32, %arg2: i32) -> (i32, i32) {
    %c0_i32 = arith.constant 0 : i32
    return %arg2, %arg1 : i32, i32
  }
  func.func @transform_2(%arg0: i32, %arg1: i32, %arg2: i32) -> (i32, i32) {
    %c0_i32 = arith.constant 0 : i32
    %c0_i32_0 = arith.constant 0 : i32
    return %c0_i32, %arg1 : i32, i32
  }
  func.func @transform_3(%arg0: i32, %arg1: i32, %arg2: i32) -> (i32, i32) {
    %c0_i32 = arith.constant 0 : i32
    return %arg0, %arg1 : i32, i32
  }
}

module attributes {stable_mosaic.version = 11 : i64} {
  func.func @_dense_kernel(%arg0: i32, %arg1: i32, %arg2: i32, %arg3: memref<16x32xbf16, #tpu.memory_space<vmem>>, %arg4: memref<32x128xbf16, #tpu.memory_space<vmem>>, %arg5: memref<1x128xf32, #tpu.memory_space<vmem>>, %arg6: memref<16x128xbf16, #tpu.memory_space<vmem>>, %arg7: memref<16x128xf32, #tpu.memory_space<vmem>>) attributes {dimension_semantics = [#tpu.dimension_semantics<parallel>, #tpu.dimension_semantics<parallel>, #tpu.dimension_semantics<arbitrary>], iteration_bounds = array<i64: 1, 1, 1>, scalar_prefetch = 0 : i64, scratch_operands = 1 : i64, tpu.core_type = #tpu.core_type<tc>, window_params = [{transform_indices = @transform_0, window_bounds = array<i64: 16, 32>}, {transform_indices = @transform_1, window_bounds = array<i64: 32, 128>}, {transform_indices = @transform_2, window_bounds = array<i64: 1, 128>}, {transform_indices = @transform_3, window_bounds = array<i64: 16, 128>}]} {
    %c0_i32 = arith.constant 0 : i32
    %0 = arith.cmpi eq, %arg2, %c0_i32 : i32
    %1 = arith.extui %0 : i1 to i32
    %c0_i32_0 = arith.constant 0 : i32
    %2 = arith.cmpi ne, %1, %c0_i32_0 : i32
    scf.if %2 {
      %cst_10 = arith.constant 0.000000e+00 : f32
      %12 = vector.broadcast %cst_10 : f32 to vector<16x128xf32>
      %c0_11 = arith.constant 0 : index
      %c0_12 = arith.constant 0 : index
      %13 = vector.load %arg7[%c0_11, %c0_12] : memref<16x128xf32, #tpu.memory_space<vmem>>, vector<16x128xf32>
      tpu.vector_store %arg7[%c0_11, %c0_12], %12 {strides = array<i32>} : memref<16x128xf32, #tpu.memory_space<vmem>>, vector<16x128xf32>,
    } else {
    }
    %c0 = arith.constant 0 : index
    %c0_1 = arith.constant 0 : index
    %3 = vector.load %arg7[%c0, %c0_1] : memref<16x128xf32, #tpu.memory_space<vmem>>, vector<16x128xf32>
    %c0_2 = arith.constant 0 : index
    %c0_3 = arith.constant 0 : index
    %4 = vector.load %arg3[%c0_2, %c0_3] : memref<16x32xbf16, #tpu.memory_space<vmem>>, vector<16x32xbf16>
    %c0_4 = arith.constant 0 : index
    %c0_5 = arith.constant 0 : index
    %5 = vector.load %arg4[%c0_4, %c0_5] : memref<32x128xbf16, #tpu.memory_space<vmem>>, vector<32x128xbf16>
    %cst = arith.constant dense<0.000000e+00> : vector<16x128xf32>
    %6 = tpu.matmul %4, %5, %cst {dimension_numbers = #tpu.dot_dimension_numbers<[1], [0], [0], [1], [0, 0, 1, 1], [], []>} : vector<16x32xbf16>, vector<32x128xbf16>, vector<16x128xf32> -> vector<16x128xf32>
    %7 = arith.addf %3, %6 : vector<16x128xf32>
    %c0_6 = arith.constant 0 : index
    %c0_7 = arith.constant 0 : index
    %8 = vector.load %arg7[%c0_6, %c0_7] : memref<16x128xf32, #tpu.memory_space<vmem>>, vector<16x128xf32>
    tpu.vector_store %arg7[%c0_6, %c0_7], %7 {strides = array<i32>} : memref<16x128xf32, #tpu.memory_space<vmem>>, vector<16x128xf32>,
    %c0_i32_8 = arith.constant 0 : i32
    %9 = arith.cmpi eq, %arg2, %c0_i32_8 : i32
    %10 = arith.extui %9 : i1 to i32
    %c0_i32_9 = arith.constant 0 : i32
    %11 = arith.cmpi ne, %10, %c0_i32_9 : i32
    scf.if %11 {
      %c0_10 = arith.constant 0 : index
      %c0_11 = arith.constant 0 : index
      %12 = vector.load %arg7[%c0_10, %c0_11] : memref<16x128xf32, #tpu.memory_space<vmem>>, vector<16x128xf32>
      %c0_12 = arith.constant 0 : index
      %c0_13 = arith.constant 0 : index
      %13 = vector.load %arg5[%c0_12, %c0_13] : memref<1x128xf32, #tpu.memory_space<vmem>>, vector<1x128xf32>
      %14 = vector.broadcast %13 : vector<1x128xf32> to vector<16x128xf32>
      %15 = arith.addf %12, %14 : vector<16x128xf32>
      %cst_14 = arith.constant 5.000000e-01 : f32
      %16 = vector.broadcast %cst_14 : f32 to vector<16x128xf32>
      %17 = arith.mulf %16, %15 : vector<16x128xf32>
      %cst_15 = arith.constant 0.707106769 : f32
      %18 = vector.broadcast %cst_15 : f32 to vector<16x128xf32>
      %19 = arith.mulf %15, %18 : vector<16x128xf32>
      %20 = math.absf %19 : vector<16x128xf32>
      %cst_16 = arith.constant 0.327591091 : f32
      %21 = vector.broadcast %cst_16 : f32 to vector<16x128xf32>
      %22 = arith.mulf %21, %20 : vector<16x128xf32>
      %cst_17 = arith.constant 1.000000e+00 : f32
      %23 = vector.broadcast %cst_17 : f32 to vector<16x128xf32>
      %24 = arith.addf %23, %22 : vector<16x128xf32>
      %cst_18 = arith.constant 1.000000e+00 : f32
      %25 = vector.broadcast %cst_18 : f32 to vector<16x128xf32>
      %26 = arith.divf %25, %24 : vector<16x128xf32>
      %cst_19 = arith.constant 1.06140542 : f32
      %27 = vector.broadcast %cst_19 : f32 to vector<16x128xf32>
      %28 = arith.mulf %27, %26 : vector<16x128xf32>
      %cst_20 = arith.constant -1.45315206 : f32
      %29 = vector.broadcast %cst_20 : f32 to vector<16x128xf32>
      %30 = arith.addf %28, %29 : vector<16x128xf32>
      %31 = arith.mulf %30, %26 : vector<16x128xf32>
      %cst_21 = arith.constant 1.42141378 : f32
      %32 = vector.broadcast %cst_21 : f32 to vector<16x128xf32>
      %33 = arith.addf %31, %32 : vector<16x128xf32>
      %34 = arith.mulf %33, %26 : vector<16x128xf32>
      %cst_22 = arith.constant -0.284496725 : f32
      %35 = vector.broadcast %cst_22 : f32 to vector<16x128xf32>
      %36 = arith.addf %34, %35 : vector<16x128xf32>
      %37 = arith.mulf %36, %26 : vector<16x128xf32>
      %cst_23 = arith.constant 0.254829586 : f32
      %38 = vector.broadcast %cst_23 : f32 to vector<16x128xf32>
      %39 = arith.addf %37, %38 : vector<16x128xf32>
      %40 = arith.mulf %39, %26 : vector<16x128xf32>
      %cst_24 = arith.constant 0.000000e+00 : f32
      %41 = vector.broadcast %cst_24 : f32 to vector<16x128xf32>
      %42 = arith.subf %41, %20 : vector<16x128xf32>
      %43 = arith.mulf %42, %20 : vector<16x128xf32>
      %44 = math.exp %43 : vector<16x128xf32>
      %45 = arith.mulf %40, %44 : vector<16x128xf32>
      %cst_25 = arith.constant 1.000000e+00 : f32
      %46 = vector.broadcast %cst_25 : f32 to vector<16x128xf32>
      %47 = arith.subf %46, %45 : vector<16x128xf32>
      %cst_26 = arith.constant 0.000000e+00 : f32
      %48 = vector.broadcast %cst_26 : f32 to vector<16x128xf32>
      %49 = arith.cmpf olt, %19, %48 : vector<16x128xf32>
      %cst_27 = arith.constant 0.000000e+00 : f32
      %50 = vector.broadcast %cst_27 : f32 to vector<16x128xf32>
      %51 = arith.subf %50, %47 : vector<16x128xf32>
      %52 = arith.select %49, %51, %47 : vector<16x128xi1>, vector<16x128xf32>
      %cst_28 = arith.constant 1.000000e+00 : f32
      %53 = vector.broadcast %cst_28 : f32 to vector<16x128xf32>
      %54 = arith.addf %53, %52 : vector<16x128xf32>
      %55 = arith.mulf %17, %54 : vector<16x128xf32>
      %56 = arith.truncf %55 : vector<16x128xf32> to vector<16x128xbf16>
      %c0_29 = arith.constant 0 : index
      %c0_30 = arith.constant 0 : index
      %57 = vector.load %arg6[%c0_29, %c0_30] : memref<16x128xbf16, #tpu.memory_space<vmem>>, vector<16x128xbf16>
      tpu.vector_store %arg6[%c0_29, %c0_30], %56 {strides = array<i32>} : memref<16x128xbf16, #tpu.memory_space<vmem>>, vector<16x128xbf16>,
    } else {
    }
    return
  }
  func.func @transform_0(%arg0: i32, %arg1: i32, %arg2: i32) -> (i32, i32) {
    %c0_i32 = arith.constant 0 : i32
    return %arg0, %arg2 : i32, i32
  }
  func.func @transform_1(%arg0: i32, %arg1: i32, %arg2: i32) -> (i32, i32) {
    %c0_i32 = arith.constant 0 : i32
    return %arg2, %arg1 : i32, i32
  }
  func.func @transform_2(%arg0: i32, %arg1: i32, %arg2: i32) -> (i32, i32) {
    %c0_i32 = arith.constant 0 : i32
    %c0_i32_0 = arith.constant 0 : i32
    return %c0_i32, %arg1 : i32, i32
  }
  func.func @transform_3(%arg0: i32, %arg1: i32, %arg2: i32) -> (i32, i32) {
    %c0_i32 = arith.constant 0 : i32
    return %arg0, %arg1 : i32, i32
  }
}

module attributes {stable_mosaic.version = 11 : i64} {
  func.func @_dense_ln_kernel(%arg0: i32, %arg1: i32, %arg2: memref<16x128xbf16, #tpu.memory_space<vmem>>, %arg3: memref<128x32xbf16, #tpu.memory_space<vmem>>, %arg4: memref<1x32xf32, #tpu.memory_space<vmem>>, %arg5: memref<16x32xbf16, #tpu.memory_space<vmem>>, %arg6: memref<1x32xf32, #tpu.memory_space<vmem>>, %arg7: memref<1x32xf32, #tpu.memory_space<vmem>>, %arg8: memref<16x32xbf16, #tpu.memory_space<vmem>>, %arg9: memref<16x32xf32, #tpu.memory_space<vmem>>) attributes {dimension_semantics = [#tpu.dimension_semantics<parallel>, #tpu.dimension_semantics<arbitrary>], iteration_bounds = array<i64: 1, 1>, scalar_prefetch = 0 : i64, scratch_operands = 1 : i64, tpu.core_type = #tpu.core_type<tc>, window_params = [{transform_indices = @transform_0, window_bounds = array<i64: 16, 128>}, {transform_indices = @transform_1, window_bounds = array<i64: 128, 32>}, {pipeline_mode = #tpu.pipeline_mode<synchronous>, transform_indices = @transform_2, window_bounds = array<i64: 1, 32>}, {transform_indices = @transform_3, window_bounds = array<i64: 16, 32>}, {pipeline_mode = #tpu.pipeline_mode<synchronous>, transform_indices = @transform_4, window_bounds = array<i64: 1, 32>}, {pipeline_mode = #tpu.pipeline_mode<synchronous>, transform_indices = @transform_5, window_bounds = array<i64: 1, 32>}, {transform_indices = @transform_6, window_bounds = array<i64: 16, 32>}]} {
    %c0_i32 = arith.constant 0 : i32
    %0 = arith.cmpi eq, %arg1, %c0_i32 : i32
    %1 = arith.extui %0 : i1 to i32
    %c0_i32_0 = arith.constant 0 : i32
    %2 = arith.cmpi ne, %1, %c0_i32_0 : i32
    scf.if %2 {
      %cst_10 = arith.constant 0.000000e+00 : f32
      %12 = vector.broadcast %cst_10 : f32 to vector<16x32xf32>
      %c0_11 = arith.constant 0 : index
      %c0_12 = arith.constant 0 : index
      %13 = vector.load %arg9[%c0_11, %c0_12] : memref<16x32xf32, #tpu.memory_space<vmem>>, vector<16x32xf32>
      tpu.vector_store %arg9[%c0_11, %c0_12], %12 {strides = array<i32>} : memref<16x32xf32, #tpu.memory_space<vmem>>, vector<16x32xf32>,
    } else {
    }
    %c0 = arith.constant 0 : index
    %c0_1 = arith.constant 0 : index
    %3 = vector.load %arg9[%c0, %c0_1] : memref<16x32xf32, #tpu.memory_space<vmem>>, vector<16x32xf32>
    %c0_2 = arith.constant 0 : index
    %c0_3 = arith.constant 0 : index
    %4 = vector.load %arg2[%c0_2, %c0_3] : memref<16x128xbf16, #tpu.memory_space<vmem>>, vector<16x128xbf16>
    %c0_4 = arith.constant 0 : index
    %c0_5 = arith.constant 0 : index
    %5 = vector.load %arg3[%c0_4, %c0_5] : memref<128x32xbf16, #tpu.memory_space<vmem>>, vector<128x32xbf16>
    %cst = arith.constant dense<0.000000e+00> : vector<16x32xf32>
    %6 = tpu.matmul %4, %5, %cst {dimension_numbers = #tpu.dot_dimension_numbers<[1], [0], [0], [1], [0, 0, 1, 1], [], []>} : vector<16x128xbf16>, vector<128x32xbf16>, vector<16x32xf32> -> vector<16x32xf32>
    %7 = arith.addf %3, %6 : vector<16x32xf32>
    %c0_6 = arith.constant 0 : index
    %c0_7 = arith.constant 0 : index
    %8 = vector.load %arg9[%c0_6, %c0_7] : memref<16x32xf32, #tpu.memory_space<vmem>>, vector<16x32xf32>
    tpu.vector_store %arg9[%c0_6, %c0_7], %7 {strides = array<i32>} : memref<16x32xf32, #tpu.memory_space<vmem>>, vector<16x32xf32>,
    %c0_i32_8 = arith.constant 0 : i32
    %9 = arith.cmpi eq, %arg1, %c0_i32_8 : i32
    %10 = arith.extui %9 : i1 to i32
    %c0_i32_9 = arith.constant 0 : i32
    %11 = arith.cmpi ne, %10, %c0_i32_9 : i32
    scf.if %11 {
      %c0_10 = arith.constant 0 : index
      %c0_11 = arith.constant 0 : index
      %12 = vector.load %arg9[%c0_10, %c0_11] : memref<16x32xf32, #tpu.memory_space<vmem>>, vector<16x32xf32>
      %c0_12 = arith.constant 0 : index
      %c0_13 = arith.constant 0 : index
      %13 = vector.load %arg4[%c0_12, %c0_13] : memref<1x32xf32, #tpu.memory_space<vmem>>, vector<1x32xf32>
      %14 = vector.broadcast %13 : vector<1x32xf32> to vector<16x32xf32>
      %15 = arith.addf %12, %14 : vector<16x32xf32>
      %c0_14 = arith.constant 0 : index
      %c0_15 = arith.constant 0 : index
      %16 = vector.load %arg5[%c0_14, %c0_15] : memref<16x32xbf16, #tpu.memory_space<vmem>>, vector<16x32xbf16>
      %17 = arith.extf %16 : vector<16x32xbf16> to vector<16x32xf32>
      %18 = arith.addf %15, %17 : vector<16x32xf32>
      %cst_16 = arith.constant dense<0.000000e+00> : vector<16xf32>
      %19 = vector.multi_reduction <add>, %18, %cst_16 [1] : vector<16x32xf32> to vector<16xf32>
      %20 = vector.shape_cast %19 : vector<16xf32> to vector<16x1xf32>
      %cst_17 = arith.constant 3.200000e+01 : f32
      %21 = vector.broadcast %cst_17 : f32 to vector<16x1xf32>
      %22 = arith.divf %20, %21 : vector<16x1xf32>
      %23 = vector.broadcast %22 : vector<16x1xf32> to vector<16x32xf32>
      %24 = arith.subf %18, %23 : vector<16x32xf32>
      %25 = arith.mulf %24, %24 : vector<16x32xf32>
      %cst_18 = arith.constant dense<0.000000e+00> : vector<16xf32>
      %26 = vector.multi_reduction <add>, %25, %cst_18 [1] : vector<16x32xf32> to vector<16xf32>
      %27 = vector.shape_cast %26 : vector<16xf32> to vector<16x1xf32>
      %cst_19 = arith.constant 3.200000e+01 : f32
      %28 = vector.broadcast %cst_19 : f32 to vector<16x1xf32>
      %29 = arith.divf %27, %28 : vector<16x1xf32>
      %cst_20 = arith.constant 9.99999996E-13 : f32
      %30 = vector.broadcast %cst_20 : f32 to vector<16x1xf32>
      %31 = arith.addf %29, %30 : vector<16x1xf32>
      %32 = math.rsqrt %31 : vector<16x1xf32>
      %33 = vector.broadcast %32 : vector<16x1xf32> to vector<16x32xf32>
      %34 = arith.mulf %24, %33 : vector<16x32xf32>
      %c0_21 = arith.constant 0 : index
      %c0_22 = arith.constant 0 : index
      %35 = vector.load %arg6[%c0_21, %c0_22] : memref<1x32xf32, #tpu.memory_space<vmem>>, vector<1x32xf32>
      %36 = vector.broadcast %35 : vector<1x32xf32> to vector<16x32xf32>
      %37 = arith.mulf %34, %36 : vector<16x32xf32>
      %c0_23 = arith.constant 0 : index
      %c0_24 = arith.constant 0 : index
      %38 = vector.load %arg7[%c0_23, %c0_24] : memref<1x32xf32, #tpu.memory_space<vmem>>, vector<1x32xf32>
      %39 = vector.broadcast %38 : vector<1x32xf32> to vector<16x32xf32>
      %40 = arith.addf %37, %39 : vector<16x32xf32>
      %41 = arith.truncf %40 : vector<16x32xf32> to vector<16x32xbf16>
      %c0_25 = arith.constant 0 : index
      %c0_26 = arith.constant 0 : index
      %42 = vector.load %arg8[%c0_25, %c0_26] : memref<16x32xbf16, #tpu.memory_space<vmem>>, vector<16x32xbf16>
      tpu.vector_store %arg8[%c0_25, %c0_26], %41 {strides = array<i32>} : memref<16x32xbf16, #tpu.memory_space<vmem>>, vector<16x32xbf16>,
    } else {
    }
    return
  }
  func.func @transform_0(%arg0: i32, %arg1: i32) -> (i32, i32) {
    %c0_i32 = arith.constant 0 : i32
    return %arg0, %arg1 : i32, i32
  }
  func.func @transform_1(%arg0: i32, %arg1: i32) -> (i32, i32) {
    %c0_i32 = arith.constant 0 : i32
    %c0_i32_0 = arith.constant 0 : i32
    return %arg1, %c0_i32 : i32, i32
  }
  func.func @transform_2(%arg0: i32, %arg1: i32) -> (i32, i32) {
    %c0_i32 = arith.constant 0 : i32
    %c0_i32_0 = arith.constant 0 : i32
    %c0_i32_1 = arith.constant 0 : i32
    return %c0_i32, %c0_i32_0 : i32, i32
  }
  func.func @transform_3(%arg0: i32, %arg1: i32) -> (i32, i32) {
    %c0_i32 = arith.constant 0 : i32
    %c0_i32_0 = arith.constant 0 : i32
    return %arg0, %c0_i32 : i32, i32
  }
  func.func @transform_4(%arg0: i32, %arg1: i32) -> (i32, i32) {
    %c0_i32 = arith.constant 0 : i32
    %c0_i32_0 = arith.constant 0 : i32
    %c0_i32_1 = arith.constant 0 : i32
    return %c0_i32, %c0_i32_0 : i32, i32
  }
  func.func @transform_5(%arg0: i32, %arg1: i32) -> (i32, i32) {
    %c0_i32 = arith.constant 0 : i32
    %c0_i32_0 = arith.constant 0 : i32
    %c0_i32_1 = arith.constant 0 : i32
    return %c0_i32, %c0_i32_0 : i32, i32
  }
  func.func @transform_6(%arg0: i32, %arg1: i32) -> (i32, i32) {
    %c0_i32 = arith.constant 0 : i32
    %c0_i32_0 = arith.constant 0 : i32
    return %arg0, %c0_i32 : i32, i32
  }
}

</mosaic_0001>

<llo_original>
// kernel: bert_inter_forward.11
$region0: #{bert_inter_forward.11}
  #allocation0 [shape = 'u32[]', space=smem, size = 0x4, offset = 0x4, fixed_abs, tag = 'smem constant byte address 0x4 - core index']
  #allocation1 [shape = 'u32[144,128]{1,0:T(1,128)}', space=vmem, size = 0x12000, scoped, tag = 'internal scratch']
  %s0 = inlined_call_operand.vmem [shape: f32[16,32], index: 0, kind: input, shape index: {}]
  %s1 = inlined_call_operand.vmem [shape: f32[1,32], index: 1, kind: input, shape index: {}]
  %s2 = inlined_call_operand.vmem [shape: f32[1,32], index: 2, kind: input, shape index: {}]
  %s3 = inlined_call_operand.vmem [shape: bf16[16,32], index: 3, kind: output, shape index: {}]
  %s4 = sld [smem:[#allocation0]]
  $region22: #{bert_inter_forward.11} parent=0
    _
  %s6 = ssub.s32 1, %s4
  %s7 = scalar_select 0, %s6, %s4
  // Predicated region
  $region2: #{bert_inter_forward.11} parent=0 // pred_check
    _
  $region3: #{bert_inter_forward.11} parent=0 // pred_check_branch
    %9 = sbr.rel (0) target = $region5
  $region4: #{bert_inter_forward.11} parent=0 // pred_region
    _
  $region5: #{bert_inter_forward.11} parent=0 // pred_fallthru
    _
  // Predicated region
  $region6: #{bert_inter_forward.11} parent=0 // pred_check
    _
  $region7: #{bert_inter_forward.11} parent=0 // pred_check_branch
    %11 = sbr.rel (0) target = $region9
  $region8: #{bert_inter_forward.11} parent=0 // pred_region
    _
  $region9: #{bert_inter_forward.11} parent=0 // pred_fallthru
    _
  // Predicated region
  $region10: #{bert_inter_forward.11} parent=0 // pred_check
    _
  $region11: #{bert_inter_forward.11} parent=0 // pred_check_branch
    %13 = sbr.rel (0) target = $region13
  $region12: #{bert_inter_forward.11} parent=0 // pred_region
    _
  $region13: #{bert_inter_forward.11} parent=0 // pred_fallthru
    _
  %v14 = vld [vmem:[%s0] sm:$0xff]
  %v15 = vld [vmem:[%s0 + $0x8] sm:$0xff]
  %vm16 = vcmask 261120
  %v17 = vsel %vm16, %v14, 0.0
  %18 = vadd.xlane.f32.xlu0 %v17
  %v19 = vpop.xlane.xlu0 %18
  %v20 = vsel %vm16, %v15, 0.0
  %21 = vadd.xlane.f32.xlu0 %v20
  %v22 = vpop.xlane.xlu0 %21
  %v23 = vrcp.pop 32.0
  %v24 = vmul.f32 %v19, %v23
  %v25 = vmul.f32 %v22, %v23
  %v26 = vsub.f32 %v14, %v24
  %v27 = vsub.f32 %v15, %v25
  %v28 = vmul.f32 %v26, %v26
  %v29 = vmul.f32 %v27, %v27
  %v30 = vsel %vm16, %v28, 0.0
  %31 = vadd.xlane.f32.xlu0 %v30
  %v32 = vpop.xlane.xlu0 %31
  %v33 = vsel %vm16, %v29, 0.0
  %34 = vadd.xlane.f32.xlu0 %v33
  %v35 = vpop.xlane.xlu0 %34
  %v36 = vmul.f32 %v32, %v23
  %v37 = vmul.f32 %v35, %v23
  %v38 = vadd.f32 %v36, 1e-12
  %v39 = vadd.f32 %v37, 1e-12
  %v40 = vrsqrt.pop %v38
  %v41 = vrsqrt.pop %v39
  %v42 = vmul.f32 %v26, %v40
  %v43 = vmul.f32 %v27, %v41
  %v44 = vld [vmem:[%s1] sm:$0x1]
  %v46 = vlaneseq
  %v47 = vshrl.u32 %v46, 7
  %v48 = vsub.s32 0, %v47
  %v49 = vrot.slane %v44, %v48
  %v51 = vmul.f32 %v42, %v49
  %v52 = vmul.f32 %v43, %v49
  %v53 = vld [vmem:[%s2] sm:$0x1]
  %v55 = vlaneseq
  %v56 = vshrl.u32 %v55, 7
  %v57 = vsub.s32 0, %v56
  %v58 = vrot.slane %v53, %v57
  %v60 = vadd.f32 %v51, %v58
  %v61 = vadd.f32 %v52, %v58
  %v62 = vpack.c.bf16 %v61, %v60
  %v64 = vunpack.c.l.b16 %v62
  %v65 = vunpack.c.h.b16 %v62
  %v66 = vpack.c.b16 %v64, %v64
  %v67 = vpack.c.b16 %v65, %v65
  %vm70 = vcmask 257024
  %71 = vst.msk [vmem:[%s3] sm:$0xf] %vm70, %v66
  %72 = vst.msk [vmem:[%s3 + $0x4] sm:$0xf] %vm70, %v67
  // Predicated region
  $region14: #{bert_inter_forward.11} parent=0 // pred_check
    _
  $region15: #{bert_inter_forward.11} parent=0 // pred_check_branch
    %74 = sbr.rel (0) target = $region17
  $region16: #{bert_inter_forward.11} parent=0 // pred_region
    _
  $region17: #{bert_inter_forward.11} parent=0 // pred_fallthru
    _
  // Predicated region
  $region18: #{bert_inter_forward.11} parent=0 // pred_check
    _
  $region19: #{bert_inter_forward.11} parent=0 // pred_check_branch
    %76 = sbr.rel (0) target = $region21
  $region20: #{bert_inter_forward.11} parent=0 // pred_region
    _
  $region21: #{bert_inter_forward.11} parent=0 // pred_fallthru
    _

// kernel: bert_inter_forward.14
$region0: #{bert_inter_forward.14}
  #allocation0 [shape = 'u32[]', space=smem, size = 0x4, offset = 0x4, fixed_abs, tag = 'smem constant byte address 0x4 - core index']
  #allocation1 [shape = 'u32[144,128]{1,0:T(1,128)}', space=vmem, size = 0x12000, scoped, tag = 'internal scratch']
  #allocation2 [shape = 'f32[16,32]{1,0:T(8,128)}', space=vmem, size = 0x2000, scoped, tag = 'scratch operand']
  %s0 = inlined_call_operand.vmem [shape: bf16[16,32], index: 0, kind: input, shape index: {}]
  %s1 = inlined_call_operand.vmem [shape: bf16[32,32], index: 1, kind: input, shape index: {}]
  %s2 = inlined_call_operand.vmem [shape: f32[1,32], index: 2, kind: input, shape index: {}]
  %s3 = inlined_call_operand.vmem [shape: bf16[16,32], index: 3, kind: input, shape index: {}]
  %s4 = inlined_call_operand.vmem [shape: f32[1,32], index: 4, kind: input, shape index: {}]
  %s5 = inlined_call_operand.vmem [shape: f32[1,32], index: 5, kind: input, shape index: {}]
  %s6 = inlined_call_operand.vmem [shape: bf16[16,32], index: 6, kind: output, shape index: {}]
  %s7 = sld [smem:[#allocation0]]
  $region42: #{bert_inter_forward.14} parent=0
    _
  %s9 = ssub.s32 1, %s7
  %s10 = scalar_select 0, %s9, %s7
  // Predicated region
  $region2: #{bert_inter_forward.14} parent=0 // pred_check
    _
  $region3: #{bert_inter_forward.14} parent=0 // pred_check_branch
    %12 = sbr.rel (0) target = $region5
  $region4: #{bert_inter_forward.14} parent=0 // pred_region
    _
  $region5: #{bert_inter_forward.14} parent=0 // pred_fallthru
    _
  // Predicated region
  $region6: #{bert_inter_forward.14} parent=0 // pred_check
    _
  $region7: #{bert_inter_forward.14} parent=0 // pred_check_branch
    %14 = sbr.rel (0) target = $region9
  $region8: #{bert_inter_forward.14} parent=0 // pred_region
    _
  $region9: #{bert_inter_forward.14} parent=0 // pred_fallthru
    _
  // Predicated region
  $region10: #{bert_inter_forward.14} parent=0 // pred_check
    _
  $region11: #{bert_inter_forward.14} parent=0 // pred_check_branch
    %16 = sbr.rel (0) target = $region13
  $region12: #{bert_inter_forward.14} parent=0 // pred_region
    _
  $region13: #{bert_inter_forward.14} parent=0 // pred_fallthru
    _
  // Predicated region
  $region14: #{bert_inter_forward.14} parent=0 // pred_check
    _
  $region15: #{bert_inter_forward.14} parent=0 // pred_check_branch
    %18 = sbr.rel (0) target = $region17
  $region16: #{bert_inter_forward.14} parent=0 // pred_region
    _
  $region17: #{bert_inter_forward.14} parent=0 // pred_fallthru
    _
  // Predicated region
  $region18: #{bert_inter_forward.14} parent=0 // pred_check
    _
  $region19: #{bert_inter_forward.14} parent=0 // pred_check_branch
    %20 = sbr.rel (0) target = $region21
  $region20: #{bert_inter_forward.14} parent=0 // pred_region
    _
  $region21: #{bert_inter_forward.14} parent=0 // pred_fallthru
    _
  // Predicated region
  $region22: #{bert_inter_forward.14} parent=0 // pred_check
    _
  $region23: #{bert_inter_forward.14} parent=0 // pred_check_branch
    %22 = sbr.rel (0) target = $region25
  $region24: #{bert_inter_forward.14} parent=0 // pred_region
    _
  $region25: #{bert_inter_forward.14} parent=0 // pred_fallthru
    _
  %p24 = scmp.eq.s32.totalorder 0, 0
  // Predicated region
  $region26: #{bert_inter_forward.14} parent=0 // pred_check
    %p25 = pneg %p24
  $region27: #{bert_inter_forward.14} parent=0 // pred_check_branch
    %27 = sbr.rel (%p25) target = $region29
  $region28: #{bert_inter_forward.14} parent=0 // pred_region
    %vm28 = vcmask 261120
    %29 = vst.msk [vmem:[#allocation2] sm:$0xff] %vm28, 0.0
    %30 = vst.msk [vmem:[#allocation2 + $0x8] sm:$0xff] %vm28, 0.0
  $region29: #{bert_inter_forward.14} parent=0 // pred_fallthru
    _
  %v31 = vld [vmem:[#allocation2] sm:$0xff]
  %v32 = vld [vmem:[#allocation2 + $0x8] sm:$0xff]
  %v33 = vld [vmem:[%s0] sm:$0xf]
  %v34 = vld [vmem:[%s0 + $0x4] sm:$0xf]
  %v35 = vld [vmem:[%s1] sm:$0xf]
  %v36 = vld [vmem:[%s1 + $0x4] sm:$0xf]
  %v37 = vld [vmem:[%s1 + $0x8] sm:$0xf]
  %v38 = vld [vmem:[%s1 + $0xc] sm:$0xf]
  %v41 = vunpack.c.l.b16 %v33
  %v42 = vunpack.c.l.b16 %v34
  %v43 = vpack.c.b16 %v42, %v41
  %v48 = vunpack.c.l.b16 %v35
  %v49 = vunpack.c.l.b16 %v36
  %v50 = vunpack.c.l.b16 %v37
  %v51 = vunpack.c.l.b16 %v38
  %v52 = vpack.c.b16 %v49, %v48
  %v53 = vpack.c.b16 %v51, %v50
  %vm56 = vcmask 261120
  %v58 = vsel %vm56, %v43, 0
  %60 = vmatprep.subr.bf16.mxu0 0
  %61 = vmatpush1.bf16.msra.mxu0 %v52
  %62 = vmatprep.subr.bf16.mxu0 0
  %63 = vmatpush1.bf16.msra.mxu0 %v53
  %64 = vmatprep.subr.bf16.mxu0 0
  %65 = vmatpush1.bf16.msra.mxu0 0
  %66 = vmatprep.subr.bf16.mxu0 0
  %67 = vmatpush1.bf16.msra.mxu0 0
  %68 = vmatprep.subr.bf16.mxu0 0
  %69 = vmatpush1.bf16.msra.mxu0 0
  %70 = vmatprep.subr.bf16.mxu0 0
  %71 = vmatpush1.bf16.msra.mxu0 0
  %72 = vmatprep.subr.bf16.mxu0 0
  %73 = vmatpush1.bf16.msra.mxu0 0
  %74 = vmatprep.subr.bf16.mxu0 0
  %75 = vmatpush1.bf16.msra.mxu0 0
  %76 = vmatprep.subr.bf16.mxu0 0
  %77 = vmatpush1.bf16.msra.mxu0 0
  %78 = vmatprep.subr.bf16.mxu0 0
  %79 = vmatpush1.bf16.msra.mxu0 0
  %80 = vmatprep.subr.bf16.mxu0 0
  %81 = vmatpush1.bf16.msra.mxu0 0
  %82 = vmatprep.subr.bf16.mxu0 0
  %83 = vmatpush1.bf16.msra.mxu0 0
  %84 = vmatprep.subr.bf16.mxu0 0
  %85 = vmatpush1.bf16.msra.mxu0 0
  %86 = vmatprep.subr.bf16.mxu0 0
  %87 = vmatpush1.bf16.msra.mxu0 0
  %88 = vmatprep.subr.bf16.mxu0 0
  %89 = vmatpush1.bf16.msra.mxu0 0
  %90 = vmatprep.subr.bf16.mxu0 0
  %91 = vmatpush1.bf16.msra.mxu0 0
  %92 = vmatprep.mubr.bf16.mxu0 0
  %93 = vmatmul.mubr.bf16.gmra.mrb[0].mxu0 %v58
  %v94 = vpop.f32.mrb[0].mxu0
  %v95 = vadd.f32 0.0, %v94
  %v96 = vpop.f32.mrb[0].mxu0
  %v97 = vpop.f32.mrb[0].mxu0
  %v98 = vadd.f32 0.0, %v97
  %v99 = vpop.f32.mrb[0].mxu0
  %100 = vdwg.mxu0
  %v101 = vadd.f32 %v31, %v95
  %v102 = vadd.f32 %v32, %v98
  %103 = vst.msk [vmem:[#allocation2] sm:$0xff] %vm56, %v101
  %104 = vst.msk [vmem:[#allocation2 + $0x8] sm:$0xff] %vm56, %v102
  // Predicated region
  $region30: #{bert_inter_forward.14} parent=0 // pred_check
    %p105 = pneg %p24
  $region31: #{bert_inter_forward.14} parent=0 // pred_check_branch
    %107 = sbr.rel (%p105) target = $region33
  $region32: #{bert_inter_forward.14} parent=0 // pred_region
    %v108 = vld [vmem:[#allocation2] sm:$0xff]
    %v109 = vld [vmem:[#allocation2 + $0x8] sm:$0xff]
    %v110 = vld [vmem:[%s2] sm:$0x1]
    %v112 = vlaneseq
    %v113 = vshrl.u32 %v112, 7
    %v114 = vsub.s32 0, %v113
    %v115 = vrot.slane %v110, %v114
    %v117 = vadd.f32 %v108, %v115
    %v118 = vadd.f32 %v109, %v115
    %v119 = vld [vmem:[%s3] sm:$0xf]
    %v120 = vld [vmem:[%s3 + $0x4] sm:$0xf]
    %v121 = vunpack.c.l.bf16 %v119
    %v122 = vunpack.c.l.bf16 %v120
    %v123 = vadd.f32 %v117, %v121
    %v124 = vadd.f32 %v118, %v122
    %v125 = vsel %vm56, %v123, 0.0
    %126 = vadd.xlane.f32.xlu0 %v125
    %v127 = vpop.xlane.xlu0 %126
    %v128 = vsel %vm56, %v124, 0.0
    %129 = vadd.xlane.f32.xlu0 %v128
    %v130 = vpop.xlane.xlu0 %129
    %v131 = vrcp.pop 32.0
    %v132 = vmul.f32 %v127, %v131
    %v133 = vmul.f32 %v130, %v131
    %v134 = vsub.f32 %v123, %v132
    %v135 = vsub.f32 %v124, %v133
    %v136 = vmul.f32 %v134, %v134
    %v137 = vmul.f32 %v135, %v135
    %v138 = vsel %vm56, %v136, 0.0
    %139 = vadd.xlane.f32.xlu0 %v138
    %v140 = vpop.xlane.xlu0 %139
    %v141 = vsel %vm56, %v137, 0.0
    %142 = vadd.xlane.f32.xlu0 %v141
    %v143 = vpop.xlane.xlu0 %142
    %v144 = vmul.f32 %v140, %v131
    %v145 = vmul.f32 %v143, %v131
    %v146 = vadd.f32 %v144, 1e-12
    %v147 = vadd.f32 %v145, 1e-12
    %v148 = vrsqrt.pop %v146
    %v149 = vrsqrt.pop %v147
    %v150 = vmul.f32 %v134, %v148
    %v151 = vmul.f32 %v135, %v149
    %v152 = vld [vmem:[%s4] sm:$0x1]
    %v154 = vlaneseq
    %v155 = vshrl.u32 %v154, 7
    %v156 = vsub.s32 0, %v155
    %v157 = vrot.slane %v152, %v156
    %v159 = vmul.f32 %v150, %v157
    %v160 = vmul.f32 %v151, %v157
    %v161 = vld [vmem:[%s5] sm:$0x1]
    %v163 = vlaneseq
    %v164 = vshrl.u32 %v163, 7
    %v165 = vsub.s32 0, %v164
    %v166 = vrot.slane %v161, %v165
    %v168 = vadd.f32 %v159, %v166
    %v169 = vadd.f32 %v160, %v166
    %v170 = vpack.c.bf16 %v169, %v168
    %v172 = vunpack.c.l.b16 %v170
    %v173 = vunpack.c.h.b16 %v170
    %v174 = vpack.c.b16 %v172, %v172
    %v175 = vpack.c.b16 %v173, %v173
    %vm178 = vcmask 257024
    %179 = vst.msk [vmem:[%s6] sm:$0xf] %vm178, %v174
    %180 = vst.msk [vmem:[%s6 + $0x4] sm:$0xf] %vm178, %v175
  $region33: #{bert_inter_forward.14} parent=0 // pred_fallthru
    _
  // Predicated region
  $region34: #{bert_inter_forward.14} parent=0 // pred_check
    _
  $region35: #{bert_inter_forward.14} parent=0 // pred_check_branch
    %182 = sbr.rel (0) target = $region37
  $region36: #{bert_inter_forward.14} parent=0 // pred_region
    _
  $region37: #{bert_inter_forward.14} parent=0 // pred_fallthru
    _
  // Predicated region
  $region38: #{bert_inter_forward.14} parent=0 // pred_check
    _
  $region39: #{bert_inter_forward.14} parent=0 // pred_check_branch
    %184 = sbr.rel (0) target = $region41
  $region40: #{bert_inter_forward.14} parent=0 // pred_region
    _
  $region41: #{bert_inter_forward.14} parent=0 // pred_fallthru
    _

// kernel: bert_inter_forward.13
$region0: #{bert_inter_forward.13}
  #allocation0 [shape = 'u32[]', space=smem, size = 0x4, offset = 0x4, fixed_abs, tag = 'smem constant byte address 0x4 - core index']
  #allocation1 [shape = 'u32[144,128]{1,0:T(1,128)}', space=vmem, size = 0x12000, scoped, tag = 'internal scratch']
  %s0 = inlined_call_operand.vmem [shape: bf16[2,8,96], index: 0, kind: input, shape index: {}]
  %s1 = inlined_call_operand.vmem [shape: f32[2,1,8], index: 1, kind: input, shape index: {}]
  %s2 = inlined_call_operand.vmem [shape: bf16[2,8,32], index: 2, kind: output, shape index: {}]
  %s3 = sld [smem:[#allocation0]]
  $region41: #{bert_inter_forward.13} parent=0
    _
  %s5 = ssub.s32 1, %s3
  %s6 = scalar_select 0, %s5, %s3
  loop: start=0, step=1, limit=4
  $region2: #{bert_inter_forward.13} parent=0 // loop_pre_header
    _
  $region3: #{bert_inter_forward.13} parent=0 // loop_header
    %s8 = sphi 0, %s12
    %p9 = scmp.ge.s32.totalorder %s8, 4
    %s18 = sphi 0, %s20
    %s21 = sphi 0, %s18
    %s22 = sphi 0, %s21
    %s38 = sphi 0, %s22
    %s44 = sphi 0, %s46
    %s47 = sphi 0, %s44
    %s48 = sphi 0, %s47
    %s64 = sphi 0, %s48
    %s70 = sphi 0, %s72
    %s73 = sphi 0, %s70
    %s74 = sphi 0, %s73
    %s90 = sphi 0, %s74
  $region4: #{bert_inter_forward.13} parent=0 // loop_header_branch
    %11 = sbr.rel (%p9) target = $region8
  $region5: #{bert_inter_forward.13} parent=0 // loop_body
    %s13 = ssub.s32 %s8, 1
    %s14 = ssub.s32 %s8, 2
    %s15 = sadd.s32 %s8, 1
    %s16 = ssub.s32 %s8, %s15
    %p17 = scmp.eq.s32.totalorder %s16, 0
    %s19 = sadd.s32 %s18, 1
    %s20 = scalar_select %p17, %s18, %s19
    %p23 = pneg %p17
    %p24 = scmp.eq.s32.totalorder %s8, 1
    %p25 = por %p23, %p24
    %p26 = scmp.ne.s32.totalorder %s18, %s21
    %p27 = scmp.eq.s32.totalorder %s8, 0
    %p28 = por %p26, %p27
    %p29 = scmp.ne.s32.totalorder %s18, %s21
    %p30 = scmp.eq.s32.totalorder %s13, 1
    %p31 = por %p29, %p30
    %p32 = scmp.ne.s32.totalorder %s21, %s22
    %p33 = scmp.eq.s32.totalorder %s13, 0
    %p34 = por %p32, %p33
    %p35 = scmp.ne.s32.totalorder %s21, %s22
    %p36 = scmp.eq.s32.totalorder %s14, 1
    %p37 = por %p35, %p36
    %p39 = scmp.ne.s32.totalorder %s22, %s38
    %p40 = scmp.eq.s32.totalorder %s14, 0
    %p41 = por %p39, %p40
    %s42 = ssub.s32 %s8, %s15
    %p43 = scmp.eq.s32.totalorder %s42, 0
    %s45 = sadd.s32 %s44, 1
    %s46 = scalar_select %p43, %s44, %s45
    %p49 = pneg %p43
    %p50 = scmp.eq.s32.totalorder %s8, 1
    %p51 = por %p49, %p50
    %p52 = scmp.ne.s32.totalorder %s44, %s47
    %p53 = scmp.eq.s32.totalorder %s8, 0
    %p54 = por %p52, %p53
    %p55 = scmp.ne.s32.totalorder %s44, %s47
    %p56 = scmp.eq.s32.totalorder %s13, 1
    %p57 = por %p55, %p56
    %p58 = scmp.ne.s32.totalorder %s47, %s48
    %p59 = scmp.eq.s32.totalorder %s13, 0
    %p60 = por %p58, %p59
    %p61 = scmp.ne.s32.totalorder %s47, %s48
    %p62 = scmp.eq.s32.totalorder %s14, 1
    %p63 = por %p61, %p62
    %p65 = scmp.ne.s32.totalorder %s48, %s64
    %p66 = scmp.eq.s32.totalorder %s14, 0
    %p67 = por %p65, %p66
    %s68 = ssub.s32 %s8, %s15
    %p69 = scmp.eq.s32.totalorder %s68, 0
    %s71 = sadd.s32 %s70, 1
    %s72 = scalar_select %p69, %s70, %s71
    %p75 = pneg %p69
    %p76 = scmp.eq.s32.totalorder %s8, 1
    %p77 = por %p75, %p76
    %p78 = scmp.ne.s32.totalorder %s70, %s73
    %p79 = scmp.eq.s32.totalorder %s8, 0
    %p80 = por %p78, %p79
    %p81 = scmp.ne.s32.totalorder %s70, %s73
    %p82 = scmp.eq.s32.totalorder %s13, 1
    %p83 = por %p81, %p82
    %p84 = scmp.ne.s32.totalorder %s73, %s74
    %p85 = scmp.eq.s32.totalorder %s13, 0
    %p86 = por %p84, %p85
    %p87 = scmp.ne.s32.totalorder %s73, %s74
    %p88 = scmp.eq.s32.totalorder %s14, 1
    %p89 = por %p87, %p88
    %p91 = scmp.ne.s32.totalorder %s74, %s90
    %p92 = scmp.eq.s32.totalorder %s14, 0
    %p93 = por %p91, %p92
    %p94 = scmp.le.s32.totalorder 1, %s8
    %p95 = scmp.lt.s32.totalorder %s8, 3
    %p96 = pnand %p94, %p95
    %p97 = pneg %p96
    // Predicated region
    $region9: #{bert_inter_forward.13} parent=5 // pred_check
      _
    $region10: #{bert_inter_forward.13} parent=5 // pred_check_branch
      %99 = sbr.rel (%p96) target = $region12
    $region11: #{bert_inter_forward.13} parent=5 // pred_region
      %s100 = ssub.s32 %s8, 1
    $region12: #{bert_inter_forward.13} parent=5 // pred_fallthru
      _
    %p101 = scmp.lt.s32.totalorder %s8, 2
    // Predicated region
    $region13: #{bert_inter_forward.13} parent=5 // pred_check
      %p102 = pneg %p101
    $region14: #{bert_inter_forward.13} parent=5 // pred_check_branch
      %104 = sbr.rel (%p102) target = $region16
    $region15: #{bert_inter_forward.13} parent=5 // pred_region
      // Predicated region
      $region17: #{bert_inter_forward.13} parent=15 // pred_check
        %p105 = pneg %p28
      $region18: #{bert_inter_forward.13} parent=15 // pred_check_branch
        %107 = sbr.rel (%p105) target = $region20
      $region19: #{bert_inter_forward.13} parent=15 // pred_region
        %p108 = scmp.lt.s32.totalorder %s8, 1
        %s109 = scalar_select %p108, %s8, 1
        %s110 = smul.addr %s109, 4
        %s111 = scalar_lea.vmem %s0, %s110
      $region20: #{bert_inter_forward.13} parent=15 // pred_fallthru
        _
      // Predicated region
      $region21: #{bert_inter_forward.13} parent=15 // pred_check
        %p112 = pneg %p54
      $region22: #{bert_inter_forward.13} parent=15 // pred_check_branch
        %114 = sbr.rel (%p112) target = $region24
      $region23: #{bert_inter_forward.13} parent=15 // pred_region
        %p115 = scmp.lt.s32.totalorder %s8, 1
        %s116 = scalar_select %p115, %s8, 1
        %s117 = scalar_lea.vmem %s1, %s116
      $region24: #{bert_inter_forward.13} parent=15 // pred_fallthru
        _
    $region16: #{bert_inter_forward.13} parent=5 // pred_fallthru
      _
    %p118 = scmp.le.s32.totalorder 1, %s8
    %p119 = scmp.lt.s32.totalorder %s8, 3
    %p120 = pnand %p118, %p119
    %p121 = pneg %p120
    // Predicated region
    $region25: #{bert_inter_forward.13} parent=5 // pred_check
      _
    $region26: #{bert_inter_forward.13} parent=5 // pred_check_branch
      %123 = sbr.rel (%p120) target = $region28
    $region27: #{bert_inter_forward.13} parent=5 // pred_region
      %s124 = ssub.s32 %s8, 1
      %p125 = scmp.lt.s32.totalorder %s13, 1
      %s126 = scalar_select %p125, %s13, 1
      %s127 = smul.addr %s126, 4
      %s128 = scalar_lea.vmem %s0, %s127
      %p129 = pneg %p34
      %p130 = pneg %p31
      %p131 = scmp.lt.s32.totalorder %s13, 1
      %s132 = scalar_select %p131, %s13, 1
      %s133 = scalar_lea.vmem %s1, %s132
      %p134 = pneg %p60
      %p135 = pneg %p57
      %p136 = pneg %p86
      %p137 = pneg %p83
      %p138 = scmp.lt.s32.totalorder %s13, 1
      %s139 = scalar_select %p138, %s13, 1
      %s140 = smul.addr %s139, 4
      %s141 = scalar_lea.vmem %s2, %s140
      %p142 = scmp.lt.s32.totalorder %s13, 1
      %s143 = scalar_select %p142, %s13, 1
      %s144 = smul.addr %s143, 4
      %s145 = scalar_lea.vmem %s0, %s144
      %p146 = scmp.lt.s32.totalorder %s13, 1
      %s147 = scalar_select %p146, %s13, 1
      %s148 = scalar_lea.vmem %s1, %s147
      %p149 = scmp.lt.s32.totalorder %s13, 1
      %s150 = scalar_select %p149, %s13, 1
      %s151 = smul.addr %s150, 4
      %s152 = scalar_lea.vmem %s2, %s151
      %v154 = vld [vmem:[%s148] sm:$0x1]
      %v155 = vld [vmem:[%s145] sm:$0xf]
      %v157 = vlaneseq
      %v158 = vshrl.u32 %v157, 7
      %v159 = vsub.s32 0, %v158
      %v160 = vrot.slane %v154, %v159
      %v163 = vunpack.c.l.b16 %v155
      %v164 = vpack.c.b16 %v163, %v163
      %165 = vrot.lane.b32.xlu0 %v164, 96
      %v166 = vpop.permute.xlu0 %165
      %vm167 = vcmask 64512
      %v169 = vsel %vm167, %v155, 0
      %v172 = vsel %vm167, %v166, 0
      %174 = vmatprep.subr.bf16.mxu0 0
      %175 = vmatpush1.bf16.xpose.msra.mxu0 %v172
      %176 = vmatprep.subr.bf16.mxu0 0
      %177 = vmatpush1.bf16.xpose.msra.mxu0 0
      %178 = vmatprep.subr.bf16.mxu0 0
      %179 = vmatpush1.bf16.xpose.msra.mxu0 0
      %180 = vmatprep.subr.bf16.mxu0 0
      %181 = vmatpush1.bf16.xpose.msra.mxu0 0
      %182 = vmatprep.subr.bf16.mxu0 0
      %183 = vmatpush1.bf16.xpose.msra.mxu0 0
      %184 = vmatprep.subr.bf16.mxu0 0
      %185 = vmatpush1.bf16.xpose.msra.mxu0 0
      %186 = vmatprep.subr.bf16.mxu0 0
      %187 = vmatpush1.bf16.xpose.msra.mxu0 0
      %188 = vmatprep.subr.bf16.mxu0 0
      %189 = vmatpush1.bf16.xpose.msra.mxu0 0
      %190 = vmatprep.subr.bf16.mxu0 0
      %191 = vmatpush1.bf16.xpose.msra.mxu0 0
      %192 = vmatprep.subr.bf16.mxu0 0
      %193 = vmatpush1.bf16.xpose.msra.mxu0 0
      %194 = vmatprep.subr.bf16.mxu0 0
      %195 = vmatpush1.bf16.xpose.msra.mxu0 0
      %196 = vmatprep.subr.bf16.mxu0 0
      %197 = vmatpush1.bf16.xpose.msra.mxu0 0
      %198 = vmatprep.subr.bf16.mxu0 0
      %199 = vmatpush1.bf16.xpose.msra.mxu0 0
      %200 = vmatprep.subr.bf16.mxu0 0
      %201 = vmatpush1.bf16.xpose.msra.mxu0 0
      %202 = vmatprep.subr.bf16.mxu0 0
      %203 = vmatpush1.bf16.xpose.msra.mxu0 0
      %204 = vmatprep.subr.bf16.mxu0 0
      %205 = vmatpush1.bf16.xpose.msra.mxu0 0
      %206 = vmatprep.mubr.bf16.mxu0 0
      %207 = vmatmul.mubr.bf16.gmra.mrb[0].mxu0 %v169
      %v208 = vpop.f32.mrb[0].mxu0
      %v209 = vadd.f32 %v160, %v208
      %v210 = vpop.f32.mrb[0].mxu0
      %v211 = vpop.f32.mrb[0].mxu0
      %v212 = vpop.f32.mrb[0].mxu0
      %213 = vdwg.mxu0
      %v214 = vsel %vm167, %v209, -inf
      %215 = vmax.xlane.f32.xlu0 %v214
      %v216 = vpop.xlane.xlu0 %215
      %v217 = vsub.f32 %v209, %v216
      %v218 = vmul.f32 %v217, 1.442695
      %v219 = vpow.pop %v218
      %v220 = vsel %vm167, %v219, 0.0
      %221 = vadd.xlane.f32.xlu0 %v220
      %v222 = vpop.xlane.xlu0 %221
      %v223 = vrcp.pop %v222
      %v224 = vmul.f32 %v219, %v223
      %v225 = vpack.c.bf16 %v224, %v224
      %226 = vrot.lane.b32.xlu0 %v164, 64
      %v227 = vpop.permute.xlu0 %226
      %v229 = vsel %vm167, %v225, 0
      %vm231 = vcmask 1043456
      %v233 = vsel %vm231, %v227, 0
      %235 = vmatprep.subr.bf16.mxu0 0
      %236 = vmatpush1.bf16.msra.mxu0 %v233
      %237 = vmatprep.subr.bf16.mxu0 0
      %238 = vmatpush1.bf16.msra.mxu0 0
      %239 = vmatprep.subr.bf16.mxu0 0
      %240 = vmatpush1.bf16.msra.mxu0 0
      %241 = vmatprep.subr.bf16.mxu0 0
      %242 = vmatpush1.bf16.msra.mxu0 0
      %243 = vmatprep.subr.bf16.mxu0 0
      %244 = vmatpush1.bf16.msra.mxu0 0
      %245 = vmatprep.subr.bf16.mxu0 0
      %246 = vmatpush1.bf16.msra.mxu0 0
      %247 = vmatprep.subr.bf16.mxu0 0
      %248 = vmatpush1.bf16.msra.mxu0 0
      %249 = vmatprep.subr.bf16.mxu0 0
      %250 = vmatpush1.bf16.msra.mxu0 0
      %251 = vmatprep.subr.bf16.mxu0 0
      %252 = vmatpush1.bf16.msra.mxu0 0
      %253 = vmatprep.subr.bf16.mxu0 0
      %254 = vmatpush1.bf16.msra.mxu0 0
      %255 = vmatprep.subr.bf16.mxu0 0
      %256 = vmatpush1.bf16.msra.mxu0 0
      %257 = vmatprep.subr.bf16.mxu0 0
      %258 = vmatpush1.bf16.msra.mxu0 0
      %259 = vmatprep.subr.bf16.mxu0 0
      %260 = vmatpush1.bf16.msra.mxu0 0
      %261 = vmatprep.subr.bf16.mxu0 0
      %262 = vmatpush1.bf16.msra.mxu0 0
      %263 = vmatprep.subr.bf16.mxu0 0
      %264 = vmatpush1.bf16.msra.mxu0 0
      %265 = vmatprep.subr.bf16.mxu0 0
      %266 = vmatpush1.bf16.msra.mxu0 0
      %267 = vmatprep.mubr.bf16.mxu0 0
      %268 = vmatmul.mubr.bf16.gmra.mrb[0].mxu0 %v229
      %v269 = vpop.f32.mrb[0].mxu0
      %v270 = vadd.f32 0.0, %v269
      %v271 = vpop.f32.mrb[0].mxu0
      %v272 = vpop.f32.mrb[0].mxu0
      %v273 = vpop.f32.mrb[0].mxu0
      %274 = vdwg.mxu0
      %v275 = vpack.c.bf16 %v270, %v270
      %vm276 = vcmask 60416
      %277 = vst.msk [vmem:[%s152] sm:$0xf] %vm276, %v275
      %278 = vrot.lane.b32.xlu0 %v164, 120
      %v279 = vpop.permute.xlu0 %278
      %280 = vrot.lane.b32.xlu0 %v164, 88
      %v281 = vpop.permute.xlu0 %280
      %v283 = vsel %vm167, %v279, 0
      %v286 = vsel %vm167, %v281, 0
      %288 = vmatprep.subr.bf16.mxu0 0
      %289 = vmatpush1.bf16.xpose.msra.mxu0 %v286
      %290 = vmatprep.subr.bf16.mxu0 0
      %291 = vmatpush1.bf16.xpose.msra.mxu0 0
      %292 = vmatprep.subr.bf16.mxu0 0
      %293 = vmatpush1.bf16.xpose.msra.mxu0 0
      %294 = vmatprep.subr.bf16.mxu0 0
      %295 = vmatpush1.bf16.xpose.msra.mxu0 0
      %296 = vmatprep.subr.bf16.mxu0 0
      %297 = vmatpush1.bf16.xpose.msra.mxu0 0
      %298 = vmatprep.subr.bf16.mxu0 0
      %299 = vmatpush1.bf16.xpose.msra.mxu0 0
      %300 = vmatprep.subr.bf16.mxu0 0
      %301 = vmatpush1.bf16.xpose.msra.mxu0 0
      %302 = vmatprep.subr.bf16.mxu0 0
      %303 = vmatpush1.bf16.xpose.msra.mxu0 0
      %304 = vmatprep.subr.bf16.mxu0 0
      %305 = vmatpush1.bf16.xpose.msra.mxu0 0
      %306 = vmatprep.subr.bf16.mxu0 0
      %307 = vmatpush1.bf16.xpose.msra.mxu0 0
      %308 = vmatprep.subr.bf16.mxu0 0
      %309 = vmatpush1.bf16.xpose.msra.mxu0 0
      %310 = vmatprep.subr.bf16.mxu0 0
      %311 = vmatpush1.bf16.xpose.msra.mxu0 0
      %312 = vmatprep.subr.bf16.mxu0 0
      %313 = vmatpush1.bf16.xpose.msra.mxu0 0
      %314 = vmatprep.subr.bf16.mxu0 0
      %315 = vmatpush1.bf16.xpose.msra.mxu0 0
      %316 = vmatprep.subr.bf16.mxu0 0
      %317 = vmatpush1.bf16.xpose.msra.mxu0 0
      %318 = vmatprep.subr.bf16.mxu0 0
      %319 = vmatpush1.bf16.xpose.msra.mxu0 0
      %320 = vmatprep.mubr.bf16.mxu0 0
      %321 = vmatmul.mubr.bf16.gmra.mrb[0].mxu0 %v283
      %v322 = vpop.f32.mrb[0].mxu0
      %v323 = vadd.f32 %v160, %v322
      %v324 = vpop.f32.mrb[0].mxu0
      %v325 = vpop.f32.mrb[0].mxu0
      %v326 = vpop.f32.mrb[0].mxu0
      %327 = vdwg.mxu0
      %v328 = vsel %vm167, %v323, -inf
      %329 = vmax.xlane.f32.xlu0 %v328
      %v330 = vpop.xlane.xlu0 %329
      %v331 = vsub.f32 %v323, %v330
      %v332 = vmul.f32 %v331, 1.442695
      %v333 = vpow.pop %v332
      %v334 = vsel %vm167, %v333, 0.0
      %335 = vadd.xlane.f32.xlu0 %v334
      %v336 = vpop.xlane.xlu0 %335
      %v337 = vrcp.pop %v336
      %v338 = vmul.f32 %v333, %v337
      %v339 = vpack.c.bf16 %v338, %v338
      %340 = vrot.lane.b32.xlu0 %v164, 56
      %v341 = vpop.permute.xlu0 %340
      %v343 = vsel %vm167, %v339, 0
      %v346 = vsel %vm231, %v341, 0
      %348 = vmatprep.subr.bf16.mxu0 0
      %349 = vmatpush1.bf16.msra.mxu0 %v346
      %350 = vmatprep.subr.bf16.mxu0 0
      %351 = vmatpush1.bf16.msra.mxu0 0
      %352 = vmatprep.subr.bf16.mxu0 0
      %353 = vmatpush1.bf16.msra.mxu0 0
      %354 = vmatprep.subr.bf16.mxu0 0
      %355 = vmatpush1.bf16.msra.mxu0 0
      %356 = vmatprep.subr.bf16.mxu0 0
      %357 = vmatpush1.bf16.msra.mxu0 0
      %358 = vmatprep.subr.bf16.mxu0 0
      %359 = vmatpush1.bf16.msra.mxu0 0
      %360 = vmatprep.subr.bf16.mxu0 0
      %361 = vmatpush1.bf16.msra.mxu0 0
      %362 = vmatprep.subr.bf16.mxu0 0
      %363 = vmatpush1.bf16.msra.mxu0 0
      %364 = vmatprep.subr.bf16.mxu0 0
      %365 = vmatpush1.bf16.msra.mxu0 0
      %366 = vmatprep.subr.bf16.mxu0 0
      %367 = vmatpush1.bf16.msra.mxu0 0
      %368 = vmatprep.subr.bf16.mxu0 0
      %369 = vmatpush1.bf16.msra.mxu0 0
      %370 = vmatprep.subr.bf16.mxu0 0
      %371 = vmatpush1.bf16.msra.mxu0 0
      %372 = vmatprep.subr.bf16.mxu0 0
      %373 = vmatpush1.bf16.msra.mxu0 0
      %374 = vmatprep.subr.bf16.mxu0 0
      %375 = vmatpush1.bf16.msra.mxu0 0
      %376 = vmatprep.subr.bf16.mxu0 0
      %377 = vmatpush1.bf16.msra.mxu0 0
      %378 = vmatprep.subr.bf16.mxu0 0
      %379 = vmatpush1.bf16.msra.mxu0 0
      %380 = vmatprep.mubr.bf16.mxu0 0
      %381 = vmatmul.mubr.bf16.gmra.mrb[0].mxu0 %v343
      %v382 = vpop.f32.mrb[0].mxu0
      %v383 = vadd.f32 0.0, %v382
      %v384 = vpop.f32.mrb[0].mxu0
      %v385 = vpop.f32.mrb[0].mxu0
      %v386 = vpop.f32.mrb[0].mxu0
      %387 = vdwg.mxu0
      %v388 = vpack.c.bf16 %v383, %v383
      %v390 = vunpack.c.l.b16 %v388
      %v391 = vpack.c.b16 %v390, %v390
      %392 = vrot.lane.b32.xlu0 %v391, 8
      %v393 = vpop.permute.xlu0 %392
      %vm395 = vcmask 126016
      %396 = vst.msk [vmem:[%s152] sm:$0xf] %vm395, %v393
      %397 = vrot.lane.b32.xlu0 %v164, 112
      %v398 = vpop.permute.xlu0 %397
      %399 = vrot.lane.b32.xlu0 %v164, 80
      %v400 = vpop.permute.xlu0 %399
      %v402 = vsel %vm167, %v398, 0
      %v405 = vsel %vm167, %v400, 0
      %407 = vmatprep.subr.bf16.mxu0 0
      %408 = vmatpush1.bf16.xpose.msra.mxu0 %v405
      %409 = vmatprep.subr.bf16.mxu0 0
      %410 = vmatpush1.bf16.xpose.msra.mxu0 0
      %411 = vmatprep.subr.bf16.mxu0 0
      %412 = vmatpush1.bf16.xpose.msra.mxu0 0
      %413 = vmatprep.subr.bf16.mxu0 0
      %414 = vmatpush1.bf16.xpose.msra.mxu0 0
      %415 = vmatprep.subr.bf16.mxu0 0
      %416 = vmatpush1.bf16.xpose.msra.mxu0 0
      %417 = vmatprep.subr.bf16.mxu0 0
      %418 = vmatpush1.bf16.xpose.msra.mxu0 0
      %419 = vmatprep.subr.bf16.mxu0 0
      %420 = vmatpush1.bf16.xpose.msra.mxu0 0
      %421 = vmatprep.subr.bf16.mxu0 0
      %422 = vmatpush1.bf16.xpose.msra.mxu0 0
      %423 = vmatprep.subr.bf16.mxu0 0
      %424 = vmatpush1.bf16.xpose.msra.mxu0 0
      %425 = vmatprep.subr.bf16.mxu0 0
      %426 = vmatpush1.bf16.xpose.msra.mxu0 0
      %427 = vmatprep.subr.bf16.mxu0 0
      %428 = vmatpush1.bf16.xpose.msra.mxu0 0
      %429 = vmatprep.subr.bf16.mxu0 0
      %430 = vmatpush1.bf16.xpose.msra.mxu0 0
      %431 = vmatprep.subr.bf16.mxu0 0
      %432 = vmatpush1.bf16.xpose.msra.mxu0 0
      %433 = vmatprep.subr.bf16.mxu0 0
      %434 = vmatpush1.bf16.xpose.msra.mxu0 0
      %435 = vmatprep.subr.bf16.mxu0 0
      %436 = vmatpush1.bf16.xpose.msra.mxu0 0
      %437 = vmatprep.subr.bf16.mxu0 0
      %438 = vmatpush1.bf16.xpose.msra.mxu0 0
      %439 = vmatprep.mubr.bf16.mxu0 0
      %440 = vmatmul.mubr.bf16.gmra.mrb[0].mxu0 %v402
      %v441 = vpop.f32.mrb[0].mxu0
      %v442 = vadd.f32 %v160, %v441
      %v443 = vpop.f32.mrb[0].mxu0
      %v444 = vpop.f32.mrb[0].mxu0
      %v445 = vpop.f32.mrb[0].mxu0
      %446 = vdwg.mxu0
      %v447 = vsel %vm167, %v442, -inf
      %448 = vmax.xlane.f32.xlu0 %v447
      %v449 = vpop.xlane.xlu0 %448
      %v450 = vsub.f32 %v442, %v449
      %v451 = vmul.f32 %v450, 1.442695
      %v452 = vpow.pop %v451
      %v453 = vsel %vm167, %v452, 0.0
      %454 = vadd.xlane.f32.xlu0 %v453
      %v455 = vpop.xlane.xlu0 %454
      %v456 = vrcp.pop %v455
      %v457 = vmul.f32 %v452, %v456
      %v458 = vpack.c.bf16 %v457, %v457
      %459 = vrot.lane.b32.xlu0 %v164, 48
      %v460 = vpop.permute.xlu0 %459
      %v462 = vsel %vm167, %v458, 0
      %v465 = vsel %vm231, %v460, 0
      %467 = vmatprep.subr.bf16.mxu0 0
      %468 = vmatpush1.bf16.msra.mxu0 %v465
      %469 = vmatprep.subr.bf16.mxu0 0
      %470 = vmatpush1.bf16.msra.mxu0 0
      %471 = vmatprep.subr.bf16.mxu0 0
      %472 = vmatpush1.bf16.msra.mxu0 0
      %473 = vmatprep.subr.bf16.mxu0 0
      %474 = vmatpush1.bf16.msra.mxu0 0
      %475 = vmatprep.subr.bf16.mxu0 0
      %476 = vmatpush1.bf16.msra.mxu0 0
      %477 = vmatprep.subr.bf16.mxu0 0
      %478 = vmatpush1.bf16.msra.mxu0 0
      %479 = vmatprep.subr.bf16.mxu0 0
      %480 = vmatpush1.bf16.msra.mxu0 0
      %481 = vmatprep.subr.bf16.mxu0 0
      %482 = vmatpush1.bf16.msra.mxu0 0
      %483 = vmatprep.subr.bf16.mxu0 0
      %484 = vmatpush1.bf16.msra.mxu0 0
      %485 = vmatprep.subr.bf16.mxu0 0
      %486 = vmatpush1.bf16.msra.mxu0 0
      %487 = vmatprep.subr.bf16.mxu0 0
      %488 = vmatpush1.bf16.msra.mxu0 0
      %489 = vmatprep.subr.bf16.mxu0 0
      %490 = vmatpush1.bf16.msra.mxu0 0
      %491 = vmatprep.subr.bf16.mxu0 0
      %492 = vmatpush1.bf16.msra.mxu0 0
      %493 = vmatprep.subr.bf16.mxu0 0
      %494 = vmatpush1.bf16.msra.mxu0 0
      %495 = vmatprep.subr.bf16.mxu0 0
      %496 = vmatpush1.bf16.msra.mxu0 0
      %497 = vmatprep.subr.bf16.mxu0 0
      %498 = vmatpush1.bf16.msra.mxu0 0
      %499 = vmatprep.mubr.bf16.mxu0 0
      %500 = vmatmul.mubr.bf16.gmra.mrb[0].mxu0 %v462
      %v501 = vpop.f32.mrb[0].mxu0
      %v502 = vadd.f32 0.0, %v501
      %v503 = vpop.f32.mrb[0].mxu0
      %v504 = vpop.f32.mrb[0].mxu0
      %v505 = vpop.f32.mrb[0].mxu0
      %506 = vdwg.mxu0
      %v507 = vpack.c.bf16 %v502, %v502
      %v509 = vunpack.c.l.b16 %v507
      %v510 = vpack.c.b16 %v509, %v509
      %511 = vrot.lane.b32.xlu0 %v510, 16
      %v512 = vpop.permute.xlu0 %511
      %vm514 = vcmask 191616
      %515 = vst.msk [vmem:[%s152] sm:$0xf] %vm514, %v512
      %516 = vrot.lane.b32.xlu0 %v164, 104
      %v517 = vpop.permute.xlu0 %516
      %518 = vrot.lane.b32.xlu0 %v164, 72
      %v519 = vpop.permute.xlu0 %518
      %v521 = vsel %vm167, %v517, 0
      %v524 = vsel %vm167, %v519, 0
      %526 = vmatprep.subr.bf16.mxu0 0
      %527 = vmatpush1.bf16.xpose.msra.mxu0 %v524
      %528 = vmatprep.subr.bf16.mxu0 0
      %529 = vmatpush1.bf16.xpose.msra.mxu0 0
      %530 = vmatprep.subr.bf16.mxu0 0
      %531 = vmatpush1.bf16.xpose.msra.mxu0 0
      %532 = vmatprep.subr.bf16.mxu0 0
      %533 = vmatpush1.bf16.xpose.msra.mxu0 0
      %534 = vmatprep.subr.bf16.mxu0 0
      %535 = vmatpush1.bf16.xpose.msra.mxu0 0
      %536 = vmatprep.subr.bf16.mxu0 0
      %537 = vmatpush1.bf16.xpose.msra.mxu0 0
      %538 = vmatprep.subr.bf16.mxu0 0
      %539 = vmatpush1.bf16.xpose.msra.mxu0 0
      %540 = vmatprep.subr.bf16.mxu0 0
      %541 = vmatpush1.bf16.xpose.msra.mxu0 0
      %542 = vmatprep.subr.bf16.mxu0 0
      %543 = vmatpush1.bf16.xpose.msra.mxu0 0
      %544 = vmatprep.subr.bf16.mxu0 0
      %545 = vmatpush1.bf16.xpose.msra.mxu0 0
      %546 = vmatprep.subr.bf16.mxu0 0
      %547 = vmatpush1.bf16.xpose.msra.mxu0 0
      %548 = vmatprep.subr.bf16.mxu0 0
      %549 = vmatpush1.bf16.xpose.msra.mxu0 0
      %550 = vmatprep.subr.bf16.mxu0 0
      %551 = vmatpush1.bf16.xpose.msra.mxu0 0
      %552 = vmatprep.subr.bf16.mxu0 0
      %553 = vmatpush1.bf16.xpose.msra.mxu0 0
      %554 = vmatprep.subr.bf16.mxu0 0
      %555 = vmatpush1.bf16.xpose.msra.mxu0 0
      %556 = vmatprep.subr.bf16.mxu0 0
      %557 = vmatpush1.bf16.xpose.msra.mxu0 0
      %558 = vmatprep.mubr.bf16.mxu0 0
      %559 = vmatmul.mubr.bf16.gmra.mrb[0].mxu0 %v521
      %v560 = vpop.f32.mrb[0].mxu0
      %v561 = vadd.f32 %v160, %v560
      %v562 = vpop.f32.mrb[0].mxu0
      %v563 = vpop.f32.mrb[0].mxu0
      %v564 = vpop.f32.mrb[0].mxu0
      %565 = vdwg.mxu0
      %v566 = vsel %vm167, %v561, -inf
      %567 = vmax.xlane.f32.xlu0 %v566
      %v568 = vpop.xlane.xlu0 %567
      %v569 = vsub.f32 %v561, %v568
      %v570 = vmul.f32 %v569, 1.442695
      %v571 = vpow.pop %v570
      %v572 = vsel %vm167, %v571, 0.0
      %573 = vadd.xlane.f32.xlu0 %v572
      %v574 = vpop.xlane.xlu0 %573
      %v575 = vrcp.pop %v574
      %v576 = vmul.f32 %v571, %v575
      %v577 = vpack.c.bf16 %v576, %v576
      %578 = vrot.lane.b32.xlu0 %v164, 40
      %v579 = vpop.permute.xlu0 %578
      %v581 = vsel %vm167, %v577, 0
      %v584 = vsel %vm231, %v579, 0
      %586 = vmatprep.subr.bf16.mxu0 0
      %587 = vmatpush1.bf16.msra.mxu0 %v584
      %588 = vmatprep.subr.bf16.mxu0 0
      %589 = vmatpush1.bf16.msra.mxu0 0
      %590 = vmatprep.subr.bf16.mxu0 0
      %591 = vmatpush1.bf16.msra.mxu0 0
      %592 = vmatprep.subr.bf16.mxu0 0
      %593 = vmatpush1.bf16.msra.mxu0 0
      %594 = vmatprep.subr.bf16.mxu0 0
      %595 = vmatpush1.bf16.msra.mxu0 0
      %596 = vmatprep.subr.bf16.mxu0 0
      %597 = vmatpush1.bf16.msra.mxu0 0
      %598 = vmatprep.subr.bf16.mxu0 0
      %599 = vmatpush1.bf16.msra.mxu0 0
      %600 = vmatprep.subr.bf16.mxu0 0
      %601 = vmatpush1.bf16.msra.mxu0 0
      %602 = vmatprep.subr.bf16.mxu0 0
      %603 = vmatpush1.bf16.msra.mxu0 0
      %604 = vmatprep.subr.bf16.mxu0 0
      %605 = vmatpush1.bf16.msra.mxu0 0
      %606 = vmatprep.subr.bf16.mxu0 0
      %607 = vmatpush1.bf16.msra.mxu0 0
      %608 = vmatprep.subr.bf16.mxu0 0
      %609 = vmatpush1.bf16.msra.mxu0 0
      %610 = vmatprep.subr.bf16.mxu0 0
      %611 = vmatpush1.bf16.msra.mxu0 0
      %612 = vmatprep.subr.bf16.mxu0 0
      %613 = vmatpush1.bf16.msra.mxu0 0
      %614 = vmatprep.subr.bf16.mxu0 0
      %615 = vmatpush1.bf16.msra.mxu0 0
      %616 = vmatprep.subr.bf16.mxu0 0
      %617 = vmatpush1.bf16.msra.mxu0 0
      %618 = vmatprep.mubr.bf16.mxu0 0
      %619 = vmatmul.mubr.bf16.gmra.mrb[0].mxu0 %v581
      %v620 = vpop.f32.mrb[0].mxu0
      %v621 = vadd.f32 0.0, %v620
      %v622 = vpop.f32.mrb[0].mxu0
      %v623 = vpop.f32.mrb[0].mxu0
      %v624 = vpop.f32.mrb[0].mxu0
      %625 = vdwg.mxu0
      %v626 = vpack.c.bf16 %v621, %v621
      %v628 = vunpack.c.l.b16 %v626
      %v629 = vpack.c.b16 %v628, %v628
      %630 = vrot.lane.b32.xlu0 %v629, 24
      %v631 = vpop.permute.xlu0 %630
      %vm633 = vcmask 257216
      %634 = vst.msk [vmem:[%s152] sm:$0xf] %vm633, %v631
      %p635 = scmp.lt.s32.totalorder %s13, 1
      %s636 = scalar_select %p635, %s13, 1
      %s637 = smul.addr %s636, 4
      %s638 = scalar_lea.vmem %s2, %s637
      // Predicated region
      $region29: #{bert_inter_forward.13} parent=27 // pred_check
        %p639 = pneg %p83
      $region30: #{bert_inter_forward.13} parent=27 // pred_check_branch
        %641 = sbr.rel (%p639) target = $region32
      $region31: #{bert_inter_forward.13} parent=27 // pred_region
        _
      $region32: #{bert_inter_forward.13} parent=27 // pred_fallthru
        _
    $region28: #{bert_inter_forward.13} parent=5 // pred_fallthru
      _
    %p642 = scmp.le.s32.totalorder 2, %s8
    // Predicated region
    $region33: #{bert_inter_forward.13} parent=5 // pred_check
      %p643 = pneg %p642
    $region34: #{bert_inter_forward.13} parent=5 // pred_check_branch
      %645 = sbr.rel (%p643) target = $region36
    $region35: #{bert_inter_forward.13} parent=5 // pred_region
      %s646 = ssub.s32 %s8, 2
      // Predicated region
      $region37: #{bert_inter_forward.13} parent=35 // pred_check
        %p647 = pneg %p89
      $region38: #{bert_inter_forward.13} parent=35 // pred_check_branch
        %649 = sbr.rel (%p647) target = $region40
      $region39: #{bert_inter_forward.13} parent=35 // pred_region
        %p650 = scmp.lt.s32.totalorder %s14, 1
        %s651 = scalar_select %p650, %s14, 1
        %s652 = smul.addr %s651, 4
        %s653 = scalar_lea.vmem %s2, %s652
      $region40: #{bert_inter_forward.13} parent=35 // pred_fallthru
        _
    $region36: #{bert_inter_forward.13} parent=5 // pred_fallthru
      _
  $region6: #{bert_inter_forward.13} parent=0 // loop_footer
    %s12 = sadd.s32 1, %s8
  $region7: #{bert_inter_forward.13} parent=0 // loop_footer_branch
    %7 = sbr.rel target = $region3
  $region8: #{bert_inter_forward.13} parent=0 // loop_exit
    _

// kernel: bert_inter_forward.12
$region0: #{bert_inter_forward.12}
  #allocation0 [shape = 'u32[]', space=smem, size = 0x4, offset = 0x4, fixed_abs, tag = 'smem constant byte address 0x4 - core index']
  #allocation1 [shape = 'u32[144,128]{1,0:T(1,128)}', space=vmem, size = 0x12000, scoped, tag = 'internal scratch']
  #allocation2 [shape = 'f32[16,96]{1,0:T(8,128)}', space=vmem, size = 0x2000, scoped, tag = 'scratch operand']
  %s0 = inlined_call_operand.vmem [shape: bf16[16,32], index: 0, kind: input, shape index: {}]
  %s1 = inlined_call_operand.vmem [shape: bf16[32,96], index: 1, kind: input, shape index: {}]
  %s2 = inlined_call_operand.vmem [shape: f32[1,96], index: 2, kind: input, shape index: {}]
  %s3 = inlined_call_operand.vmem [shape: bf16[16,96], index: 3, kind: output, shape index: {}]
  %s4 = sld [smem:[#allocation0]]
  $region30: #{bert_inter_forward.12} parent=0
    _
  %s6 = ssub.s32 1, %s4
  %s7 = scalar_select 0, %s6, %s4
  // Predicated region
  $region2: #{bert_inter_forward.12} parent=0 // pred_check
    _
  $region3: #{bert_inter_forward.12} parent=0 // pred_check_branch
    %9 = sbr.rel (0) target = $region5
  $region4: #{bert_inter_forward.12} parent=0 // pred_region
    _
  $region5: #{bert_inter_forward.12} parent=0 // pred_fallthru
    _
  // Predicated region
  $region6: #{bert_inter_forward.12} parent=0 // pred_check
    _
  $region7: #{bert_inter_forward.12} parent=0 // pred_check_branch
    %11 = sbr.rel (0) target = $region9
  $region8: #{bert_inter_forward.12} parent=0 // pred_region
    _
  $region9: #{bert_inter_forward.12} parent=0 // pred_fallthru
    _
  // Predicated region
  $region10: #{bert_inter_forward.12} parent=0 // pred_check
    _
  $region11: #{bert_inter_forward.12} parent=0 // pred_check_branch
    %13 = sbr.rel (0) target = $region13
  $region12: #{bert_inter_forward.12} parent=0 // pred_region
    _
  $region13: #{bert_inter_forward.12} parent=0 // pred_fallthru
    _
  %p15 = scmp.eq.s32.totalorder 0, 0
  // Predicated region
  $region14: #{bert_inter_forward.12} parent=0 // pred_check
    %p16 = pneg %p15
  $region15: #{bert_inter_forward.12} parent=0 // pred_check_branch
    %18 = sbr.rel (%p16) target = $region17
  $region16: #{bert_inter_forward.12} parent=0 // pred_region
    %vm19 = vcmask 785408
    %20 = vst.msk [vmem:[#allocation2] sm:$0xff] %vm19, 0.0
    %21 = vst.msk [vmem:[#allocation2 + $0x8] sm:$0xff] %vm19, 0.0
  $region17: #{bert_inter_forward.12} parent=0 // pred_fallthru
    _
  %v22 = vld [vmem:[#allocation2] sm:$0xff]
  %v23 = vld [vmem:[#allocation2 + $0x8] sm:$0xff]
  %v24 = vld [vmem:[%s0] sm:$0xf]
  %v25 = vld [vmem:[%s0 + $0x4] sm:$0xf]
  %v26 = vld [vmem:[%s1] sm:$0xf]
  %v27 = vld [vmem:[%s1 + $0x4] sm:$0xf]
  %v28 = vld [vmem:[%s1 + $0x8] sm:$0xf]
  %v29 = vld [vmem:[%s1 + $0xc] sm:$0xf]
  %v32 = vunpack.c.l.b16 %v24
  %v33 = vunpack.c.l.b16 %v25
  %v34 = vpack.c.b16 %v33, %v32
  %v39 = vunpack.c.l.b16 %v26
  %v40 = vunpack.c.l.b16 %v27
  %v41 = vunpack.c.l.b16 %v28
  %v42 = vunpack.c.l.b16 %v29
  %v43 = vpack.c.b16 %v40, %v39
  %v44 = vpack.c.b16 %v42, %v41
  %vm47 = vcmask 261120
  %v49 = vsel %vm47, %v34, 0
  %51 = vmatprep.subr.bf16.mxu0 0
  %52 = vmatpush1.bf16.msra.mxu0 %v43
  %53 = vmatprep.subr.bf16.mxu0 0
  %54 = vmatpush1.bf16.msra.mxu0 %v44
  %55 = vmatprep.subr.bf16.mxu0 0
  %56 = vmatpush1.bf16.msra.mxu0 0
  %57 = vmatprep.subr.bf16.mxu0 0
  %58 = vmatpush1.bf16.msra.mxu0 0
  %59 = vmatprep.subr.bf16.mxu0 0
  %60 = vmatpush1.bf16.msra.mxu0 0
  %61 = vmatprep.subr.bf16.mxu0 0
  %62 = vmatpush1.bf16.msra.mxu0 0
  %63 = vmatprep.subr.bf16.mxu0 0
  %64 = vmatpush1.bf16.msra.mxu0 0
  %65 = vmatprep.subr.bf16.mxu0 0
  %66 = vmatpush1.bf16.msra.mxu0 0
  %67 = vmatprep.subr.bf16.mxu0 0
  %68 = vmatpush1.bf16.msra.mxu0 0
  %69 = vmatprep.subr.bf16.mxu0 0
  %70 = vmatpush1.bf16.msra.mxu0 0
  %71 = vmatprep.subr.bf16.mxu0 0
  %72 = vmatpush1.bf16.msra.mxu0 0
  %73 = vmatprep.subr.bf16.mxu0 0
  %74 = vmatpush1.bf16.msra.mxu0 0
  %75 = vmatprep.subr.bf16.mxu0 0
  %76 = vmatpush1.bf16.msra.mxu0 0
  %77 = vmatprep.subr.bf16.mxu0 0
  %78 = vmatpush1.bf16.msra.mxu0 0
  %79 = vmatprep.subr.bf16.mxu0 0
  %80 = vmatpush1.bf16.msra.mxu0 0
  %81 = vmatprep.subr.bf16.mxu0 0
  %82 = vmatpush1.bf16.msra.mxu0 0
  %83 = vmatprep.mubr.bf16.mxu0 0
  %84 = vmatmul.mubr.bf16.gmra.mrb[0].mxu0 %v49
  %v85 = vpop.f32.mrb[0].mxu0
  %v86 = vadd.f32 0.0, %v85
  %v87 = vpop.f32.mrb[0].mxu0
  %v88 = vpop.f32.mrb[0].mxu0
  %v89 = vadd.f32 0.0, %v88
  %v90 = vpop.f32.mrb[0].mxu0
  %91 = vdwg.mxu0
  %v92 = vadd.f32 %v22, %v86
  %v93 = vadd.f32 %v23, %v89
  %vm94 = vcmask 785408
  %95 = vst.msk [vmem:[#allocation2] sm:$0xff] %vm94, %v92
  %96 = vst.msk [vmem:[#allocation2 + $0x8] sm:$0xff] %vm94, %v93
  // Predicated region
  $region18: #{bert_inter_forward.12} parent=0 // pred_check
    %p97 = pneg %p15
  $region19: #{bert_inter_forward.12} parent=0 // pred_check_branch
    %99 = sbr.rel (%p97) target = $region21
  $region20: #{bert_inter_forward.12} parent=0 // pred_region
    %v100 = vld [vmem:[#allocation2] sm:$0xff]
    %v101 = vld [vmem:[#allocation2 + $0x8] sm:$0xff]
    %v102 = vld [vmem:[%s2] sm:$0x1]
    %v104 = vlaneseq
    %v105 = vshrl.u32 %v104, 7
    %v106 = vsub.s32 0, %v105
    %v107 = vrot.slane %v102, %v106
    %v109 = vadd.f32 %v100, %v107
    %v110 = vadd.f32 %v101, %v107
    %v111 = vpack.c.bf16 %v110, %v109
    %v113 = vunpack.c.l.b16 %v111
    %v114 = vunpack.c.h.b16 %v111
    %v115 = vpack.c.b16 %v113, %v113
    %v116 = vpack.c.b16 %v114, %v114
    %vm119 = vcmask 781312
    %120 = vst.msk [vmem:[%s3] sm:$0xf] %vm119, %v115
    %121 = vst.msk [vmem:[%s3 + $0x4] sm:$0xf] %vm119, %v116
  $region21: #{bert_inter_forward.12} parent=0 // pred_fallthru
    _
  // Predicated region
  $region22: #{bert_inter_forward.12} parent=0 // pred_check
    _
  $region23: #{bert_inter_forward.12} parent=0 // pred_check_branch
    %123 = sbr.rel (0) target = $region25
  $region24: #{bert_inter_forward.12} parent=0 // pred_region
    _
  $region25: #{bert_inter_forward.12} parent=0 // pred_fallthru
    _
  // Predicated region
  $region26: #{bert_inter_forward.12} parent=0 // pred_check
    _
  $region27: #{bert_inter_forward.12} parent=0 // pred_check_branch
    %125 = sbr.rel (0) target = $region29
  $region28: #{bert_inter_forward.12} parent=0 // pred_region
    _
  $region29: #{bert_inter_forward.12} parent=0 // pred_fallthru
    _

// kernel: bert_inter_forward.15
$region0: #{bert_inter_forward.15}
  #allocation0 [shape = 'u32[]', space=smem, size = 0x4, offset = 0x4, fixed_abs, tag = 'smem constant byte address 0x4 - core index']
  #allocation1 [shape = 'u32[144,128]{1,0:T(1,128)}', space=vmem, size = 0x12000, scoped, tag = 'internal scratch']
  #allocation2 [shape = 'f32[16,128]{1,0:T(8,128)}', space=vmem, size = 0x2000, scoped, tag = 'scratch operand']
  %s0 = inlined_call_operand.vmem [shape: bf16[16,32], index: 0, kind: input, shape index: {}]
  %s1 = inlined_call_operand.vmem [shape: bf16[32,128], index: 1, kind: input, shape index: {}]
  %s2 = inlined_call_operand.vmem [shape: f32[1,128], index: 2, kind: input, shape index: {}]
  %s3 = inlined_call_operand.vmem [shape: bf16[16,128], index: 3, kind: output, shape index: {}]
  %s4 = sld [smem:[#allocation0]]
  $region30: #{bert_inter_forward.15} parent=0
    _
  %s6 = ssub.s32 1, %s4
  %s7 = scalar_select 0, %s6, %s4
  // Predicated region
  $region2: #{bert_inter_forward.15} parent=0 // pred_check
    _
  $region3: #{bert_inter_forward.15} parent=0 // pred_check_branch
    %9 = sbr.rel (0) target = $region5
  $region4: #{bert_inter_forward.15} parent=0 // pred_region
    _
  $region5: #{bert_inter_forward.15} parent=0 // pred_fallthru
    _
  // Predicated region
  $region6: #{bert_inter_forward.15} parent=0 // pred_check
    _
  $region7: #{bert_inter_forward.15} parent=0 // pred_check_branch
    %11 = sbr.rel (0) target = $region9
  $region8: #{bert_inter_forward.15} parent=0 // pred_region
    _
  $region9: #{bert_inter_forward.15} parent=0 // pred_fallthru
    _
  // Predicated region
  $region10: #{bert_inter_forward.15} parent=0 // pred_check
    _
  $region11: #{bert_inter_forward.15} parent=0 // pred_check_branch
    %13 = sbr.rel (0) target = $region13
  $region12: #{bert_inter_forward.15} parent=0 // pred_region
    _
  $region13: #{bert_inter_forward.15} parent=0 // pred_fallthru
    _
  %p15 = scmp.eq.s32.totalorder 0, 0
  // Predicated region
  $region14: #{bert_inter_forward.15} parent=0 // pred_check
    %p16 = pneg %p15
  $region15: #{bert_inter_forward.15} parent=0 // pred_check_branch
    %18 = sbr.rel (%p16) target = $region17
  $region16: #{bert_inter_forward.15} parent=0 // pred_region
    %19 = vst [vmem:[#allocation2] sm:$0xff] 0.0
    %20 = vst [vmem:[#allocation2 + $0x8] sm:$0xff] 0.0
  $region17: #{bert_inter_forward.15} parent=0 // pred_fallthru
    _
  %v21 = vld [vmem:[#allocation2] sm:$0xff]
  %v22 = vld [vmem:[#allocation2 + $0x8] sm:$0xff]
  %v23 = vld [vmem:[%s0] sm:$0xf]
  %v24 = vld [vmem:[%s0 + $0x4] sm:$0xf]
  %v25 = vld [vmem:[%s1] sm:$0xf]
  %v26 = vld [vmem:[%s1 + $0x4] sm:$0xf]
  %v27 = vld [vmem:[%s1 + $0x8] sm:$0xf]
  %v28 = vld [vmem:[%s1 + $0xc] sm:$0xf]
  %v31 = vunpack.c.l.b16 %v23
  %v32 = vunpack.c.l.b16 %v24
  %v33 = vpack.c.b16 %v32, %v31
  %v38 = vunpack.c.l.b16 %v25
  %v39 = vunpack.c.l.b16 %v26
  %v40 = vunpack.c.l.b16 %v27
  %v41 = vunpack.c.l.b16 %v28
  %v42 = vpack.c.b16 %v39, %v38
  %v43 = vpack.c.b16 %v41, %v40
  %vm46 = vcmask 261120
  %v48 = vsel %vm46, %v33, 0
  %50 = vmatprep.subr.bf16.mxu0 0
  %51 = vmatpush1.bf16.msra.mxu0 %v42
  %52 = vmatprep.subr.bf16.mxu0 0
  %53 = vmatpush1.bf16.msra.mxu0 %v43
  %54 = vmatprep.subr.bf16.mxu0 0
  %55 = vmatpush1.bf16.msra.mxu0 0
  %56 = vmatprep.subr.bf16.mxu0 0
  %57 = vmatpush1.bf16.msra.mxu0 0
  %58 = vmatprep.subr.bf16.mxu0 0
  %59 = vmatpush1.bf16.msra.mxu0 0
  %60 = vmatprep.subr.bf16.mxu0 0
  %61 = vmatpush1.bf16.msra.mxu0 0
  %62 = vmatprep.subr.bf16.mxu0 0
  %63 = vmatpush1.bf16.msra.mxu0 0
  %64 = vmatprep.subr.bf16.mxu0 0
  %65 = vmatpush1.bf16.msra.mxu0 0
  %66 = vmatprep.subr.bf16.mxu0 0
  %67 = vmatpush1.bf16.msra.mxu0 0
  %68 = vmatprep.subr.bf16.mxu0 0
  %69 = vmatpush1.bf16.msra.mxu0 0
  %70 = vmatprep.subr.bf16.mxu0 0
  %71 = vmatpush1.bf16.msra.mxu0 0
  %72 = vmatprep.subr.bf16.mxu0 0
  %73 = vmatpush1.bf16.msra.mxu0 0
  %74 = vmatprep.subr.bf16.mxu0 0
  %75 = vmatpush1.bf16.msra.mxu0 0
  %76 = vmatprep.subr.bf16.mxu0 0
  %77 = vmatpush1.bf16.msra.mxu0 0
  %78 = vmatprep.subr.bf16.mxu0 0
  %79 = vmatpush1.bf16.msra.mxu0 0
  %80 = vmatprep.subr.bf16.mxu0 0
  %81 = vmatpush1.bf16.msra.mxu0 0
  %82 = vmatprep.mubr.bf16.mxu0 0
  %83 = vmatmul.mubr.bf16.gmra.mrb[0].mxu0 %v48
  %v84 = vpop.f32.mrb[0].mxu0
  %v85 = vadd.f32 0.0, %v84
  %v86 = vpop.f32.mrb[0].mxu0
  %v87 = vpop.f32.mrb[0].mxu0
  %v88 = vadd.f32 0.0, %v87
  %v89 = vpop.f32.mrb[0].mxu0
  %90 = vdwg.mxu0
  %v91 = vadd.f32 %v21, %v85
  %v92 = vadd.f32 %v22, %v88
  %93 = vst [vmem:[#allocation2] sm:$0xff] %v91
  %94 = vst [vmem:[#allocation2 + $0x8] sm:$0xff] %v92
  // Predicated region
  $region18: #{bert_inter_forward.15} parent=0 // pred_check
    %p95 = pneg %p15
  $region19: #{bert_inter_forward.15} parent=0 // pred_check_branch
    %97 = sbr.rel (%p95) target = $region21
  $region20: #{bert_inter_forward.15} parent=0 // pred_region
    %v98 = vld [vmem:[#allocation2] sm:$0xff]
    %v99 = vld [vmem:[#allocation2 + $0x8] sm:$0xff]
    %v100 = vld [vmem:[%s2] sm:$0x1]
    %v102 = vlaneseq
    %v103 = vshrl.u32 %v102, 7
    %v104 = vsub.s32 0, %v103
    %v105 = vrot.slane %v100, %v104
    %v107 = vadd.f32 %v98, %v105
    %v108 = vadd.f32 %v99, %v105
    %v109 = vmul.f32 %v107, 0.5
    %v110 = vmul.f32 %v108, 0.5
    %v111 = vmul.f32 %v107, 0.70710677
    %v112 = vmul.f32 %v108, 0.70710677
    %v113 = vand.u32 2147483647, %v111
    %v114 = vand.u32 2147483647, %v112
    %v115 = vmul.f32 %v113, 0.3275911
    %v116 = vmul.f32 %v114, 0.3275911
    %v117 = vadd.f32 %v115, 1.0
    %v118 = vadd.f32 %v116, 1.0
    %v119 = vrcp.pop %v117
    %v120 = vmul.f32 1.0, %v119
    %v121 = vrcp.pop %v118
    %v122 = vmul.f32 1.0, %v121
    %v123 = vmul.f32 %v120, 1.0614054
    %v124 = vmul.f32 %v122, 1.0614054
    %v125 = vadd.f32 %v123, -1.4531521
    %v126 = vadd.f32 %v124, -1.4531521
    %v127 = vmul.f32 %v125, %v120
    %v128 = vmul.f32 %v126, %v122
    %v129 = vadd.f32 %v127, 1.4214138
    %v130 = vadd.f32 %v128, 1.4214138
    %v131 = vmul.f32 %v129, %v120
    %v132 = vmul.f32 %v130, %v122
    %v133 = vadd.f32 %v131, -0.28449672
    %v134 = vadd.f32 %v132, -0.28449672
    %v135 = vmul.f32 %v133, %v120
    %v136 = vmul.f32 %v134, %v122
    %v137 = vadd.f32 %v135, 0.2548296
    %v138 = vadd.f32 %v136, 0.2548296
    %v139 = vmul.f32 %v137, %v120
    %v140 = vmul.f32 %v138, %v122
    %v141 = vsub.f32 0.0, %v113
    %v142 = vsub.f32 0.0, %v114
    %v143 = vmul.f32 %v141, %v113
    %v144 = vmul.f32 %v142, %v114
    %v145 = vmul.f32 %v143, 1.442695
    %v146 = vpow.pop %v145
    %v147 = vmul.f32 %v144, 1.442695
    %v148 = vpow.pop %v147
    %v149 = vmul.f32 %v139, %v146
    %v150 = vmul.f32 %v140, %v148
    %v151 = vsub.f32 1.0, %v149
    %v152 = vsub.f32 1.0, %v150
    %vm153 = vcmp.lt.f32.partialorder %v111, 0.0
    %vm154 = vcmp.lt.f32.partialorder %v112, 0.0
    %v155 = vsub.f32 0.0, %v151
    %v156 = vsub.f32 0.0, %v152
    %v157 = vsel %vm153, %v155, %v151
    %v158 = vsel %vm154, %v156, %v152
    %v159 = vadd.f32 %v157, 1.0
    %v160 = vadd.f32 %v158, 1.0
    %v161 = vmul.f32 %v109, %v159
    %v162 = vmul.f32 %v110, %v160
    %v163 = vpack.c.bf16 %v162, %v161
    %v165 = vunpack.c.l.b16 %v163
    %v166 = vunpack.c.h.b16 %v163
    %v167 = vpack.c.b16 %v165, %v165
    %v168 = vpack.c.b16 %v166, %v166
    %171 = vst [vmem:[%s3] sm:$0xf] %v167
    %172 = vst [vmem:[%s3 + $0x4] sm:$0xf] %v168
  $region21: #{bert_inter_forward.15} parent=0 // pred_fallthru
    _
  // Predicated region
  $region22: #{bert_inter_forward.15} parent=0 // pred_check
    _
  $region23: #{bert_inter_forward.15} parent=0 // pred_check_branch
    %174 = sbr.rel (0) target = $region25
  $region24: #{bert_inter_forward.15} parent=0 // pred_region
    _
  $region25: #{bert_inter_forward.15} parent=0 // pred_fallthru
    _
  // Predicated region
  $region26: #{bert_inter_forward.15} parent=0 // pred_check
    _
  $region27: #{bert_inter_forward.15} parent=0 // pred_check_branch
    %176 = sbr.rel (0) target = $region29
  $region28: #{bert_inter_forward.15} parent=0 // pred_region
    _
  $region29: #{bert_inter_forward.15} parent=0 // pred_fallthru
    _

// kernel: bert_inter_forward.16
$region0: #{bert_inter_forward.16}
  #allocation0 [shape = 'u32[]', space=smem, size = 0x4, offset = 0x4, fixed_abs, tag = 'smem constant byte address 0x4 - core index']
  #allocation1 [shape = 'u32[144,128]{1,0:T(1,128)}', space=vmem, size = 0x12000, scoped, tag = 'internal scratch']
  #allocation2 [shape = 'f32[16,32]{1,0:T(8,128)}', space=vmem, size = 0x2000, scoped, tag = 'scratch operand']
  %s0 = inlined_call_operand.vmem [shape: bf16[16,128], index: 0, kind: input, shape index: {}]
  %s1 = inlined_call_operand.vmem [shape: bf16[128,32], index: 1, kind: input, shape index: {}]
  %s2 = inlined_call_operand.vmem [shape: f32[1,32], index: 2, kind: input, shape index: {}]
  %s3 = inlined_call_operand.vmem [shape: bf16[16,32], index: 3, kind: input, shape index: {}]
  %s4 = inlined_call_operand.vmem [shape: f32[1,32], index: 4, kind: input, shape index: {}]
  %s5 = inlined_call_operand.vmem [shape: f32[1,32], index: 5, kind: input, shape index: {}]
  %s6 = inlined_call_operand.vmem [shape: bf16[16,32], index: 6, kind: output, shape index: {}]
  %s7 = sld [smem:[#allocation0]]
  $region42: #{bert_inter_forward.16} parent=0
    _
  %s9 = ssub.s32 1, %s7
  %s10 = scalar_select 0, %s9, %s7
  // Predicated region
  $region2: #{bert_inter_forward.16} parent=0 // pred_check
    _
  $region3: #{bert_inter_forward.16} parent=0 // pred_check_branch
    %12 = sbr.rel (0) target = $region5
  $region4: #{bert_inter_forward.16} parent=0 // pred_region
    _
  $region5: #{bert_inter_forward.16} parent=0 // pred_fallthru
    _
  // Predicated region
  $region6: #{bert_inter_forward.16} parent=0 // pred_check
    _
  $region7: #{bert_inter_forward.16} parent=0 // pred_check_branch
    %14 = sbr.rel (0) target = $region9
  $region8: #{bert_inter_forward.16} parent=0 // pred_region
    _
  $region9: #{bert_inter_forward.16} parent=0 // pred_fallthru
    _
  // Predicated region
  $region10: #{bert_inter_forward.16} parent=0 // pred_check
    _
  $region11: #{bert_inter_forward.16} parent=0 // pred_check_branch
    %16 = sbr.rel (0) target = $region13
  $region12: #{bert_inter_forward.16} parent=0 // pred_region
    _
  $region13: #{bert_inter_forward.16} parent=0 // pred_fallthru
    _
  // Predicated region
  $region14: #{bert_inter_forward.16} parent=0 // pred_check
    _
  $region15: #{bert_inter_forward.16} parent=0 // pred_check_branch
    %18 = sbr.rel (0) target = $region17
  $region16: #{bert_inter_forward.16} parent=0 // pred_region
    _
  $region17: #{bert_inter_forward.16} parent=0 // pred_fallthru
    _
  // Predicated region
  $region18: #{bert_inter_forward.16} parent=0 // pred_check
    _
  $region19: #{bert_inter_forward.16} parent=0 // pred_check_branch
    %20 = sbr.rel (0) target = $region21
  $region20: #{bert_inter_forward.16} parent=0 // pred_region
    _
  $region21: #{bert_inter_forward.16} parent=0 // pred_fallthru
    _
  // Predicated region
  $region22: #{bert_inter_forward.16} parent=0 // pred_check
    _
  $region23: #{bert_inter_forward.16} parent=0 // pred_check_branch
    %22 = sbr.rel (0) target = $region25
  $region24: #{bert_inter_forward.16} parent=0 // pred_region
    _
  $region25: #{bert_inter_forward.16} parent=0 // pred_fallthru
    _
  %p24 = scmp.eq.s32.totalorder 0, 0
  // Predicated region
  $region26: #{bert_inter_forward.16} parent=0 // pred_check
    %p25 = pneg %p24
  $region27: #{bert_inter_forward.16} parent=0 // pred_check_branch
    %27 = sbr.rel (%p25) target = $region29
  $region28: #{bert_inter_forward.16} parent=0 // pred_region
    %vm28 = vcmask 261120
    %29 = vst.msk [vmem:[#allocation2] sm:$0xff] %vm28, 0.0
    %30 = vst.msk [vmem:[#allocation2 + $0x8] sm:$0xff] %vm28, 0.0
  $region29: #{bert_inter_forward.16} parent=0 // pred_fallthru
    _
  %v31 = vld [vmem:[#allocation2] sm:$0xff]
  %v32 = vld [vmem:[#allocation2 + $0x8] sm:$0xff]
  %v33 = vld [vmem:[%s0] sm:$0xf]
  %v34 = vld [vmem:[%s0 + $0x4] sm:$0xf]
  %v35 = vld [vmem:[%s1] sm:$0xf]
  %v36 = vld [vmem:[%s1 + $0x4] sm:$0xf]
  %v37 = vld [vmem:[%s1 + $0x8] sm:$0xf]
  %v38 = vld [vmem:[%s1 + $0xc] sm:$0xf]
  %v39 = vld [vmem:[%s1 + $0x10] sm:$0xf]
  %v40 = vld [vmem:[%s1 + $0x14] sm:$0xf]
  %v41 = vld [vmem:[%s1 + $0x18] sm:$0xf]
  %v42 = vld [vmem:[%s1 + $0x1c] sm:$0xf]
  %v43 = vld [vmem:[%s1 + $0x20] sm:$0xf]
  %v44 = vld [vmem:[%s1 + $0x24] sm:$0xf]
  %v45 = vld [vmem:[%s1 + $0x28] sm:$0xf]
  %v46 = vld [vmem:[%s1 + $0x2c] sm:$0xf]
  %v47 = vld [vmem:[%s1 + $0x30] sm:$0xf]
  %v48 = vld [vmem:[%s1 + $0x34] sm:$0xf]
  %v49 = vld [vmem:[%s1 + $0x38] sm:$0xf]
  %v50 = vld [vmem:[%s1 + $0x3c] sm:$0xf]
  %v53 = vunpack.c.l.b16 %v33
  %v54 = vunpack.c.l.b16 %v34
  %v55 = vpack.c.b16 %v54, %v53
  %v73 = vunpack.c.l.b16 %v35
  %v74 = vunpack.c.l.b16 %v36
  %v75 = vunpack.c.l.b16 %v37
  %v76 = vunpack.c.l.b16 %v38
  %v77 = vunpack.c.l.b16 %v39
  %v78 = vunpack.c.l.b16 %v40
  %v79 = vunpack.c.l.b16 %v41
  %v80 = vunpack.c.l.b16 %v42
  %v81 = vunpack.c.l.b16 %v43
  %v82 = vunpack.c.l.b16 %v44
  %v83 = vunpack.c.l.b16 %v45
  %v84 = vunpack.c.l.b16 %v46
  %v85 = vunpack.c.l.b16 %v47
  %v86 = vunpack.c.l.b16 %v48
  %v87 = vunpack.c.l.b16 %v49
  %v88 = vunpack.c.l.b16 %v50
  %v89 = vpack.c.b16 %v74, %v73
  %v90 = vpack.c.b16 %v76, %v75
  %v91 = vpack.c.b16 %v78, %v77
  %v92 = vpack.c.b16 %v80, %v79
  %v93 = vpack.c.b16 %v82, %v81
  %v94 = vpack.c.b16 %v84, %v83
  %v95 = vpack.c.b16 %v86, %v85
  %v96 = vpack.c.b16 %v88, %v87
  %105 = vmatprep.subr.bf16.mxu0 0
  %106 = vmatpush1.bf16.msra.mxu0 %v89
  %107 = vmatprep.subr.bf16.mxu0 0
  %108 = vmatpush1.bf16.msra.mxu0 %v90
  %109 = vmatprep.subr.bf16.mxu0 0
  %110 = vmatpush1.bf16.msra.mxu0 %v91
  %111 = vmatprep.subr.bf16.mxu0 0
  %112 = vmatpush1.bf16.msra.mxu0 %v92
  %113 = vmatprep.subr.bf16.mxu0 0
  %114 = vmatpush1.bf16.msra.mxu0 %v93
  %115 = vmatprep.subr.bf16.mxu0 0
  %116 = vmatpush1.bf16.msra.mxu0 %v94
  %117 = vmatprep.subr.bf16.mxu0 0
  %118 = vmatpush1.bf16.msra.mxu0 %v95
  %119 = vmatprep.subr.bf16.mxu0 0
  %120 = vmatpush1.bf16.msra.mxu0 %v96
  %121 = vmatprep.subr.bf16.mxu0 0
  %122 = vmatpush1.bf16.msra.mxu0 0
  %123 = vmatprep.subr.bf16.mxu0 0
  %124 = vmatpush1.bf16.msra.mxu0 0
  %125 = vmatprep.subr.bf16.mxu0 0
  %126 = vmatpush1.bf16.msra.mxu0 0
  %127 = vmatprep.subr.bf16.mxu0 0
  %128 = vmatpush1.bf16.msra.mxu0 0
  %129 = vmatprep.subr.bf16.mxu0 0
  %130 = vmatpush1.bf16.msra.mxu0 0
  %131 = vmatprep.subr.bf16.mxu0 0
  %132 = vmatpush1.bf16.msra.mxu0 0
  %133 = vmatprep.subr.bf16.mxu0 0
  %134 = vmatpush1.bf16.msra.mxu0 0
  %135 = vmatprep.subr.bf16.mxu0 0
  %136 = vmatpush1.bf16.msra.mxu0 0
  %137 = vmatprep.mubr.bf16.mxu0 0
  %138 = vmatmul.mubr.bf16.gmra.mrb[0].mxu0 %v55
  %v139 = vpop.f32.mrb[0].mxu0
  %v140 = vadd.f32 0.0, %v139
  %v141 = vpop.f32.mrb[0].mxu0
  %v142 = vpop.f32.mrb[0].mxu0
  %v143 = vadd.f32 0.0, %v142
  %v144 = vpop.f32.mrb[0].mxu0
  %145 = vdwg.mxu0
  %v146 = vadd.f32 %v31, %v140
  %v147 = vadd.f32 %v32, %v143
  %vm148 = vcmask 261120
  %149 = vst.msk [vmem:[#allocation2] sm:$0xff] %vm148, %v146
  %150 = vst.msk [vmem:[#allocation2 + $0x8] sm:$0xff] %vm148, %v147
  // Predicated region
  $region30: #{bert_inter_forward.16} parent=0 // pred_check
    %p151 = pneg %p24
  $region31: #{bert_inter_forward.16} parent=0 // pred_check_branch
    %153 = sbr.rel (%p151) target = $region33
  $region32: #{bert_inter_forward.16} parent=0 // pred_region
    %v154 = vld [vmem:[#allocation2] sm:$0xff]
    %v155 = vld [vmem:[#allocation2 + $0x8] sm:$0xff]
    %v156 = vld [vmem:[%s2] sm:$0x1]
    %v158 = vlaneseq
    %v159 = vshrl.u32 %v158, 7
    %v160 = vsub.s32 0, %v159
    %v161 = vrot.slane %v156, %v160
    %v163 = vadd.f32 %v154, %v161
    %v164 = vadd.f32 %v155, %v161
    %v165 = vld [vmem:[%s3] sm:$0xf]
    %v166 = vld [vmem:[%s3 + $0x4] sm:$0xf]
    %v167 = vunpack.c.l.bf16 %v165
    %v168 = vunpack.c.l.bf16 %v166
    %v169 = vadd.f32 %v163, %v167
    %v170 = vadd.f32 %v164, %v168
    %v171 = vsel %vm148, %v169, 0.0
    %172 = vadd.xlane.f32.xlu0 %v171
    %v173 = vpop.xlane.xlu0 %172
    %v174 = vsel %vm148, %v170, 0.0
    %175 = vadd.xlane.f32.xlu0 %v174
    %v176 = vpop.xlane.xlu0 %175
    %v177 = vrcp.pop 32.0
    %v178 = vmul.f32 %v173, %v177
    %v179 = vmul.f32 %v176, %v177
    %v180 = vsub.f32 %v169, %v178
    %v181 = vsub.f32 %v170, %v179
    %v182 = vmul.f32 %v180, %v180
    %v183 = vmul.f32 %v181, %v181
    %v184 = vsel %vm148, %v182, 0.0
    %185 = vadd.xlane.f32.xlu0 %v184
    %v186 = vpop.xlane.xlu0 %185
    %v187 = vsel %vm148, %v183, 0.0
    %188 = vadd.xlane.f32.xlu0 %v187
    %v189 = vpop.xlane.xlu0 %188
    %v190 = vmul.f32 %v186, %v177
    %v191 = vmul.f32 %v189, %v177
    %v192 = vadd.f32 %v190, 1e-12
    %v193 = vadd.f32 %v191, 1e-12
    %v194 = vrsqrt.pop %v192
    %v195 = vrsqrt.pop %v193
    %v196 = vmul.f32 %v180, %v194
    %v197 = vmul.f32 %v181, %v195
    %v198 = vld [vmem:[%s4] sm:$0x1]
    %v200 = vlaneseq
    %v201 = vshrl.u32 %v200, 7
    %v202 = vsub.s32 0, %v201
    %v203 = vrot.slane %v198, %v202
    %v205 = vmul.f32 %v196, %v203
    %v206 = vmul.f32 %v197, %v203
    %v207 = vld [vmem:[%s5] sm:$0x1]
    %v209 = vlaneseq
    %v210 = vshrl.u32 %v209, 7
    %v211 = vsub.s32 0, %v210
    %v212 = vrot.slane %v207, %v211
    %v214 = vadd.f32 %v205, %v212
    %v215 = vadd.f32 %v206, %v212
    %v216 = vpack.c.bf16 %v215, %v214
    %v218 = vunpack.c.l.b16 %v216
    %v219 = vunpack.c.h.b16 %v216
    %v220 = vpack.c.b16 %v218, %v218
    %v221 = vpack.c.b16 %v219, %v219
    %vm224 = vcmask 257024
    %225 = vst.msk [vmem:[%s6] sm:$0xf] %vm224, %v220
    %226 = vst.msk [vmem:[%s6 + $0x4] sm:$0xf] %vm224, %v221
  $region33: #{bert_inter_forward.16} parent=0 // pred_fallthru
    _
  // Predicated region
  $region34: #{bert_inter_forward.16} parent=0 // pred_check
    _
  $region35: #{bert_inter_forward.16} parent=0 // pred_check_branch
    %228 = sbr.rel (0) target = $region37
  $region36: #{bert_inter_forward.16} parent=0 // pred_region
    _
  $region37: #{bert_inter_forward.16} parent=0 // pred_fallthru
    _
  // Predicated region
  $region38: #{bert_inter_forward.16} parent=0 // pred_check
    _
  $region39: #{bert_inter_forward.16} parent=0 // pred_check_branch
    %230 = sbr.rel (0) target = $region41
  $region40: #{bert_inter_forward.16} parent=0 // pred_region
    _
  $region41: #{bert_inter_forward.16} parent=0 // pred_fallthru
    _

</llo_original>
